<compile_context>
chip_gen: v6e
topology: v6e:2x2x1
jax: 0.10.0
libtpu: 0.0.40
codegen_flags: <defaults>
</compile_context>

<pallas_src>
import numpy as np
import jax
import jax.numpy as jnp
from jax.experimental import pallas as pl
from jax.experimental.pallas import tpu as pltpu

NUM_QUBITS = 7
DIM = 2 ** NUM_QUBITS            # 128 == one vreg lane width
NUM_LAYERS = 2
NUM_PARAMS = 2 * NUM_QUBITS * NUM_LAYERS   # RX + RZ per qubit per layer


# ----------------------------- circuit construction (glue) ------------------
def build_input_circuit(n):
    """Synthetic stand-in for the qiskit QuantumCircuit passed to forward().
    Ops are (name, wires, param)."""
    ops = []
    for q in range(n):
        ops.append(('h', (q,), None))
    for q in range(n - 1):
        ops.append(('cx', (q, q + 1), None))
    ops.append(('x', (2,), None))
    ops.append(('y', (4,), None))
    ops.append(('z', (5,), None))
    ops.append(('cz', (1, 3), None))
    ops.append(('rx', (0,), 0.3))
    ops.append(('rz', (n - 1,), -0.7))
    return ops


def pqc_arch_func(n, params):
    """Hardware-efficient ansatz: RX/RZ per qubit + CNOT ring, layered."""
    ops = []
    p = 0
    num_layers = int(len(params)) // (2 * n)
    for _ in range(num_layers):
        for q in range(n):
            ops.append(('rx', (q,), params[p])); p += 1
        for q in range(n):
            ops.append(('rz', (q,), params[p])); p += 1
        for q in range(n):
            ops.append(('cx', (q, (q + 1) % n), None))
    return ops


def build_plan(ops):
    """Split ops into a static structure plan and a list of runtime angles."""
    plan, angles = [], []
    for name, wires, param in ops:
        lname = name.lower()
        if lname in ('rx', 'rz'):
            plan.append((lname, tuple(int(w) for w in wires), len(angles)))
            angles.append(param)
        else:
            plan.append((lname, tuple(int(w) for w in wires), None))
    return plan, angles


# ----------------------------- Pallas kernel ---------------------------------
def make_statevector_kernel(plan, n):
    """Kernel closure over the static gate structure.

    trig_ref : SMEM f32[2*P]   -- [cos(t0/2), sin(t0/2), cos(t1/2), ...]
    out_ref  : VMEM f32[2, D]  -- row 0 = Re(psi), row 1 = Im(psi)
    """
    d = 2 ** n

    def stride_of(wire):
        return 1 << (n - 1 - wire)       # wire 0 = most significant bit

    def kernel(trig_ref, out_ref):
        lane = jax.lax.broadcasted_iota(jnp.int32, (1, d), 1)
        re = jnp.where(lane == 0, 1.0, 0.0).astype(jnp.float32)   # |0...0>
        im = jnp.zeros((1, d), jnp.float32)

        def partner(x, stride, bit0):
            # x[i XOR stride] via two lane rotations (XLU) + select (VPU).
            lo = pltpu.roll(x, (d - stride) % d, axis=1)   # x[i + stride]
            hi = pltpu.roll(x, stride, axis=1)             # x[i - stride]
            return jnp.where(bit0, lo, hi)

        inv_sqrt2 = np.float32(1.0 / np.sqrt(2.0))

        for name, wires, pidx in plan:
            if name == 'h':
                s = stride_of(wires[0])
                bit0 = (lane & s) == 0
                re_p = partner(re, s, bit0)
                im_p = partner(im, s, bit0)
                re = jnp.where(bit0, re + re_p, re_p - re) * inv_sqrt2
                im = jnp.where(bit0, im + im_p, im_p - im) * inv_sqrt2
            elif name in ('x', 'pauli-x'):
                s = stride_of(wires[0])
                bit0 = (lane & s) == 0
                re = partner(re, s, bit0)
                im = partner(im, s, bit0)
            elif name in ('y', 'pauli-y'):
                s = stride_of(wires[0])
                bit0 = (lane & s) == 0
                re_p = partner(re, s, bit0)
                im_p = partner(im, s, bit0)
                sgn = jnp.where(bit0, 1.0, -1.0).astype(jnp.float32)
                re, im = sgn * im_p, -sgn * re_p
            elif name in ('z', 'pauli-z'):
                s = stride_of(wires[0])
                bit1 = (lane & s) != 0
                re = jnp.where(bit1, -re, re)
                im = jnp.where(bit1, -im, im)
            elif name in ('cx', 'cnot'):
                cs = stride_of(wires[0])
                ts = stride_of(wires[1])
                bit0_t = (lane & ts) == 0
                ctrl1 = (lane & cs) != 0
                re_p = partner(re, ts, bit0_t)
                im_p = partner(im, ts, bit0_t)
                re = jnp.where(ctrl1, re_p, re)
                im = jnp.where(ctrl1, im_p, im)
            elif name == 'cz':
                s0 = stride_of(wires[0])
                s1 = stride_of(wires[1])
                both = ((lane & s0) != 0) & ((lane & s1) != 0)
                re = jnp.where(both, -re, re)
                im = jnp.where(both, -im, im)
            elif name == 'rx':
                s = stride_of(wires[0])
                bit0 = (lane & s) == 0
                c = trig_ref[2 * pidx]          # scalar from SMEM
                sn = trig_ref[2 * pidx + 1]
                re_p = partner(re, s, bit0)
                im_p = partner(im, s, bit0)
                re, im = c * re + sn * im_p, c * im - sn * re_p
            elif name == 'rz':
                s = stride_of(wires[0])
                bit0 = (lane & s) == 0
                c = trig_ref[2 * pidx]
                sn = trig_ref[2 * pidx + 1]
                sgn = jnp.where(bit0, 1.0, -1.0).astype(jnp.float32)
                re, im = c * re + sgn * sn * im, c * im - sgn * sn * re
            else:
                raise ValueError(f'Unsupported gate: {name}')

        out_ref[0:1, :] = re
        out_ref[1:2, :] = im

    return kernel


def simulate_statevector(plan, angles, n):
    """Returns complex64 state of length 2^n."""
    d = 2 ** n
    if angles:
        ang = jnp.stack([jnp.asarray(a, dtype=jnp.float32) for a in angles])
    else:
        ang = jnp.zeros((1,), jnp.float32)
    half = ang * 0.5
    # [c0, s0, c1, s1, ...]
    trig = jnp.stack([jnp.cos(half), jnp.sin(half)], axis=1).reshape(-1)

    out = pl.pallas_call(
        make_statevector_kernel(plan, n),
        out_shape=jax.ShapeDtypeStruct((2, d), jnp.float32),
        in_specs=[pl.BlockSpec(memory_space=pltpu.MemorySpace.SMEM)],
        out_specs=pl.BlockSpec(memory_space=pltpu.MemorySpace.VMEM),
    )(trig)
    return (out[0] + 1j * out[1]).astype(jnp.complex64)


# ----------------------------- model wrapper ---------------------------------
class SimplePennyLaneQuantumModelPallas:
    def __init__(self, num_qubits, num_params, pqc_arch, key):
        self.num_qubits = num_qubits
        # nn.Parameter(torch.randn(num_params) * 2*pi), deterministic init
        self.raw_params = jax.random.normal(key, (num_params,),
                                            dtype=jnp.float32) * 2.0 * np.pi
        self.pqc_arch = pqc_arch
        # kept for parity with the original module; unused in forward
        self.perm = [int(f'{i:0{num_qubits}b}'[::-1], 2)
                     for i in range(2 ** num_qubits)]

    def forward(self, circuit_ops):
        all_ops = list(circuit_ops) + self.pqc_arch(self.num_qubits,
                                                    self.raw_params)
        plan, angles = build_plan(all_ops)
        state = simulate_statevector(plan, angles, self.num_qubits)
        return state, all_ops


# ----------------------------- independent reference -------------------------
def gate_matrix(name, param):
    name = name.lower()
    if name == 'h':
        return np.array([[1, 1], [1, -1]], dtype=np.complex128) / np.sqrt(2)
    if name in ('x', 'pauli-x'):
        return np.array([[0, 1], [1, 0]], dtype=np.complex128)
    if name in ('y', 'pauli-y'):
        return np.array([[0, -1j], [1j, 0]], dtype=np.complex128)
    if name in ('z', 'pauli-z'):
        return np.array([[1, 0], [0, -1]], dtype=np.complex128)
    if name in ('cx', 'cnot'):
        return np.array([[1, 0, 0, 0],
                         [0, 1, 0, 0],
                         [0, 0, 0, 1],
                         [0, 0, 1, 0]], dtype=np.complex128)
    if name == 'cz':
        return np.diag([1, 1, 1, -1]).astype(np.complex128)
    if name == 'rx':
        t = float(np.asarray(param))
        c, s = np.cos(t / 2.0), np.sin(t / 2.0)
        return np.array([[c, -1j * s], [-1j * s, c]], dtype=np.complex128)
    if name == 'rz':
        t = float(np.asarray(param))
        return np.array([[np.exp(-1j * t / 2.0), 0],
                         [0, np.exp(1j * t / 2.0)]], dtype=np.complex128)
    raise ValueError(f'Unsupported gate: {name}')


def reference_state(ops, n):
    """Apply each small gate directly to the (2,)*n state tensor -- fully
    independent of the Pallas kernel's lane-permutation formulation."""
    psi = np.zeros((2,) * n, dtype=np.complex128)
    psi[(0,) * n] = 1.0
    for name, wires, param in ops:
        G = gate_matrix(name, param)
        k = len(wires)
        Gt = G.reshape((2,) * (2 * k))
        psi = np.tensordot(Gt, psi,
                           axes=(list(range(k, 2 * k)), list(wires)))
        psi = np.moveaxis(psi, list(range(k)), list(wires))
    return psi.reshape(-1)


# ----------------------------- main ------------------------------------------
if __name__ == "__main__":
    key = jax.random.PRNGKey(0)
    model = SimplePennyLaneQuantumModelPallas(NUM_QUBITS, NUM_PARAMS,
                                              pqc_arch_func, key)
    circuit_ops = build_input_circuit(NUM_QUBITS)

    state, all_ops = model.forward(circuit_ops)
    state = jax.block_until_ready(state)

    ref = reference_state(all_ops, NUM_QUBITS)
    np.testing.assert_allclose(np.asarray(state), ref.astype(np.complex64),
                               atol=1e-4, rtol=1e-4)
    np.testing.assert_allclose(np.sum(np.abs(np.asarray(state)) ** 2), 1.0,
                               atol=1e-4)

    print("KERNEL_OK")
</pallas_src>

<mosaic_0001>
module attributes {stable_mosaic.version = 11 : i64} {
  func.func @kernel(%arg0: memref<60xf32, #tpu.memory_space<smem>>, %arg1: memref<2x128xf32, #tpu.memory_space<vmem>>) attributes {dimension_semantics = [], scalar_prefetch = 0 : i64, scratch_operands = 0 : i64, tpu.core_type = #tpu.core_type<tc>} {
    %0 = tpu.iota {dimensions = array<i32: 1>} : vector<1x128xi32>
    %c0_i32 = arith.constant 0 : i32
    %1 = vector.broadcast %c0_i32 : i32 to vector<1x128xi32>
    %2 = arith.cmpi eq, %0, %1 : vector<1x128xi32>
    %cst = arith.constant 1.000000e+00 : f32
    %cst_0 = arith.constant 0.000000e+00 : f32
    %3 = vector.broadcast %cst : f32 to vector<1x128xf32>
    %4 = vector.broadcast %cst_0 : f32 to vector<1x128xf32>
    %5 = arith.select %2, %3, %4 : vector<1x128xi1>, vector<1x128xf32>
    %cst_1 = arith.constant 0.000000e+00 : f32
    %6 = vector.broadcast %cst_1 : f32 to vector<1x128xf32>
    %c64_i32 = arith.constant 64 : i32
    %7 = vector.broadcast %c64_i32 : i32 to vector<1x128xi32>
    %8 = arith.andi %0, %7 : vector<1x128xi32>
    %c0_i32_2 = arith.constant 0 : i32
    %9 = vector.broadcast %c0_i32_2 : i32 to vector<1x128xi32>
    %10 = arith.cmpi eq, %8, %9 : vector<1x128xi32>
    %c64_i32_3 = arith.constant 64 : i32
    %11 = tpu.dynamic_rotate %5 by %c64_i32_3 dim 1 : vector<1x128xf32>, i32 -> vector<1x128xf32>
    %c64_i32_4 = arith.constant 64 : i32
    %12 = tpu.dynamic_rotate %5 by %c64_i32_4 dim 1 : vector<1x128xf32>, i32 -> vector<1x128xf32>
    %13 = arith.select %10, %11, %12 : vector<1x128xi1>, vector<1x128xf32>
    %c64_i32_5 = arith.constant 64 : i32
    %14 = tpu.dynamic_rotate %6 by %c64_i32_5 dim 1 : vector<1x128xf32>, i32 -> vector<1x128xf32>
    %c64_i32_6 = arith.constant 64 : i32
    %15 = tpu.dynamic_rotate %6 by %c64_i32_6 dim 1 : vector<1x128xf32>, i32 -> vector<1x128xf32>
    %16 = arith.select %10, %14, %15 : vector<1x128xi1>, vector<1x128xf32>
    %17 = arith.addf %5, %13 : vector<1x128xf32>
    %18 = arith.subf %13, %5 : vector<1x128xf32>
    %19 = arith.select %10, %17, %18 : vector<1x128xi1>, vector<1x128xf32>
    %cst_7 = arith.constant 0.707106769 : f32
    %20 = vector.broadcast %cst_7 : f32 to vector<1x128xf32>
    %21 = arith.mulf %19, %20 : vector<1x128xf32>
    %22 = arith.addf %6, %16 : vector<1x128xf32>
    %23 = arith.subf %16, %6 : vector<1x128xf32>
    %24 = arith.select %10, %22, %23 : vector<1x128xi1>, vector<1x128xf32>
    %cst_8 = arith.constant 0.707106769 : f32
    %25 = vector.broadcast %cst_8 : f32 to vector<1x128xf32>
    %26 = arith.mulf %24, %25 : vector<1x128xf32>
    %c32_i32 = arith.constant 32 : i32
    %27 = vector.broadcast %c32_i32 : i32 to vector<1x128xi32>
    %28 = arith.andi %0, %27 : vector<1x128xi32>
    %c0_i32_9 = arith.constant 0 : i32
    %29 = vector.broadcast %c0_i32_9 : i32 to vector<1x128xi32>
    %30 = arith.cmpi eq, %28, %29 : vector<1x128xi32>
    %c96_i32 = arith.constant 96 : i32
    %31 = tpu.dynamic_rotate %21 by %c96_i32 dim 1 : vector<1x128xf32>, i32 -> vector<1x128xf32>
    %c32_i32_10 = arith.constant 32 : i32
    %32 = tpu.dynamic_rotate %21 by %c32_i32_10 dim 1 : vector<1x128xf32>, i32 -> vector<1x128xf32>
    %33 = arith.select %30, %31, %32 : vector<1x128xi1>, vector<1x128xf32>
    %c96_i32_11 = arith.constant 96 : i32
    %34 = tpu.dynamic_rotate %26 by %c96_i32_11 dim 1 : vector<1x128xf32>, i32 -> vector<1x128xf32>
    %c32_i32_12 = arith.constant 32 : i32
    %35 = tpu.dynamic_rotate %26 by %c32_i32_12 dim 1 : vector<1x128xf32>, i32 -> vector<1x128xf32>
    %36 = arith.select %30, %34, %35 : vector<1x128xi1>, vector<1x128xf32>
    %37 = arith.addf %21, %33 : vector<1x128xf32>
    %38 = arith.subf %33, %21 : vector<1x128xf32>
    %39 = arith.select %30, %37, %38 : vector<1x128xi1>, vector<1x128xf32>
    %cst_13 = arith.constant 0.707106769 : f32
    %40 = vector.broadcast %cst_13 : f32 to vector<1x128xf32>
    %41 = arith.mulf %39, %40 : vector<1x128xf32>
    %42 = arith.addf %26, %36 : vector<1x128xf32>
    %43 = arith.subf %36, %26 : vector<1x128xf32>
    %44 = arith.select %30, %42, %43 : vector<1x128xi1>, vector<1x128xf32>
    %cst_14 = arith.constant 0.707106769 : f32
    %45 = vector.broadcast %cst_14 : f32 to vector<1x128xf32>
    %46 = arith.mulf %44, %45 : vector<1x128xf32>
    %c16_i32 = arith.constant 16 : i32
    %47 = vector.broadcast %c16_i32 : i32 to vector<1x128xi32>
    %48 = arith.andi %0, %47 : vector<1x128xi32>
    %c0_i32_15 = arith.constant 0 : i32
    %49 = vector.broadcast %c0_i32_15 : i32 to vector<1x128xi32>
    %50 = arith.cmpi eq, %48, %49 : vector<1x128xi32>
    %c112_i32 = arith.constant 112 : i32
    %51 = tpu.dynamic_rotate %41 by %c112_i32 dim 1 : vector<1x128xf32>, i32 -> vector<1x128xf32>
    %c16_i32_16 = arith.constant 16 : i32
    %52 = tpu.dynamic_rotate %41 by %c16_i32_16 dim 1 : vector<1x128xf32>, i32 -> vector<1x128xf32>
    %53 = arith.select %50, %51, %52 : vector<1x128xi1>, vector<1x128xf32>
    %c112_i32_17 = arith.constant 112 : i32
    %54 = tpu.dynamic_rotate %46 by %c112_i32_17 dim 1 : vector<1x128xf32>, i32 -> vector<1x128xf32>
    %c16_i32_18 = arith.constant 16 : i32
    %55 = tpu.dynamic_rotate %46 by %c16_i32_18 dim 1 : vector<1x128xf32>, i32 -> vector<1x128xf32>
    %56 = arith.select %50, %54, %55 : vector<1x128xi1>, vector<1x128xf32>
    %57 = arith.addf %41, %53 : vector<1x128xf32>
    %58 = arith.subf %53, %41 : vector<1x128xf32>
    %59 = arith.select %50, %57, %58 : vector<1x128xi1>, vector<1x128xf32>
    %cst_19 = arith.constant 0.707106769 : f32
    %60 = vector.broadcast %cst_19 : f32 to vector<1x128xf32>
    %61 = arith.mulf %59, %60 : vector<1x128xf32>
    %62 = arith.addf %46, %56 : vector<1x128xf32>
    %63 = arith.subf %56, %46 : vector<1x128xf32>
    %64 = arith.select %50, %62, %63 : vector<1x128xi1>, vector<1x128xf32>
    %cst_20 = arith.constant 0.707106769 : f32
    %65 = vector.broadcast %cst_20 : f32 to vector<1x128xf32>
    %66 = arith.mulf %64, %65 : vector<1x128xf32>
    %c8_i32 = arith.constant 8 : i32
    %67 = vector.broadcast %c8_i32 : i32 to vector<1x128xi32>
    %68 = arith.andi %0, %67 : vector<1x128xi32>
    %c0_i32_21 = arith.constant 0 : i32
    %69 = vector.broadcast %c0_i32_21 : i32 to vector<1x128xi32>
    %70 = arith.cmpi eq, %68, %69 : vector<1x128xi32>
    %c120_i32 = arith.constant 120 : i32
    %71 = tpu.dynamic_rotate %61 by %c120_i32 dim 1 : vector<1x128xf32>, i32 -> vector<1x128xf32>
    %c8_i32_22 = arith.constant 8 : i32
    %72 = tpu.dynamic_rotate %61 by %c8_i32_22 dim 1 : vector<1x128xf32>, i32 -> vector<1x128xf32>
    %73 = arith.select %70, %71, %72 : vector<1x128xi1>, vector<1x128xf32>
    %c120_i32_23 = arith.constant 120 : i32
    %74 = tpu.dynamic_rotate %66 by %c120_i32_23 dim 1 : vector<1x128xf32>, i32 -> vector<1x128xf32>
    %c8_i32_24 = arith.constant 8 : i32
    %75 = tpu.dynamic_rotate %66 by %c8_i32_24 dim 1 : vector<1x128xf32>, i32 -> vector<1x128xf32>
    %76 = arith.select %70, %74, %75 : vector<1x128xi1>, vector<1x128xf32>
    %77 = arith.addf %61, %73 : vector<1x128xf32>
    %78 = arith.subf %73, %61 : vector<1x128xf32>
    %79 = arith.select %70, %77, %78 : vector<1x128xi1>, vector<1x128xf32>
    %cst_25 = arith.constant 0.707106769 : f32
    %80 = vector.broadcast %cst_25 : f32 to vector<1x128xf32>
    %81 = arith.mulf %79, %80 : vector<1x128xf32>
    %82 = arith.addf %66, %76 : vector<1x128xf32>
    %83 = arith.subf %76, %66 : vector<1x128xf32>
    %84 = arith.select %70, %82, %83 : vector<1x128xi1>, vector<1x128xf32>
    %cst_26 = arith.constant 0.707106769 : f32
    %85 = vector.broadcast %cst_26 : f32 to vector<1x128xf32>
    %86 = arith.mulf %84, %85 : vector<1x128xf32>
    %c4_i32 = arith.constant 4 : i32
    %87 = vector.broadcast %c4_i32 : i32 to vector<1x128xi32>
    %88 = arith.andi %0, %87 : vector<1x128xi32>
    %c0_i32_27 = arith.constant 0 : i32
    %89 = vector.broadcast %c0_i32_27 : i32 to vector<1x128xi32>
    %90 = arith.cmpi eq, %88, %89 : vector<1x128xi32>
    %c124_i32 = arith.constant 124 : i32
    %91 = tpu.dynamic_rotate %81 by %c124_i32 dim 1 : vector<1x128xf32>, i32 -> vector<1x128xf32>
    %c4_i32_28 = arith.constant 4 : i32
    %92 = tpu.dynamic_rotate %81 by %c4_i32_28 dim 1 : vector<1x128xf32>, i32 -> vector<1x128xf32>
    %93 = arith.select %90, %91, %92 : vector<1x128xi1>, vector<1x128xf32>
    %c124_i32_29 = arith.constant 124 : i32
    %94 = tpu.dynamic_rotate %86 by %c124_i32_29 dim 1 : vector<1x128xf32>, i32 -> vector<1x128xf32>
    %c4_i32_30 = arith.constant 4 : i32
    %95 = tpu.dynamic_rotate %86 by %c4_i32_30 dim 1 : vector<1x128xf32>, i32 -> vector<1x128xf32>
    %96 = arith.select %90, %94, %95 : vector<1x128xi1>, vector<1x128xf32>
    %97 = arith.addf %81, %93 : vector<1x128xf32>
    %98 = arith.subf %93, %81 : vector<1x128xf32>
    %99 = arith.select %90, %97, %98 : vector<1x128xi1>, vector<1x128xf32>
    %cst_31 = arith.constant 0.707106769 : f32
    %100 = vector.broadcast %cst_31 : f32 to vector<1x128xf32>
    %101 = arith.mulf %99, %100 : vector<1x128xf32>
    %102 = arith.addf %86, %96 : vector<1x128xf32>
    %103 = arith.subf %96, %86 : vector<1x128xf32>
    %104 = arith.select %90, %102, %103 : vector<1x128xi1>, vector<1x128xf32>
    %cst_32 = arith.constant 0.707106769 : f32
    %105 = vector.broadcast %cst_32 : f32 to vector<1x128xf32>
    %106 = arith.mulf %104, %105 : vector<1x128xf32>
    %c2_i32 = arith.constant 2 : i32
    %107 = vector.broadcast %c2_i32 : i32 to vector<1x128xi32>
    %108 = arith.andi %0, %107 : vector<1x128xi32>
    %c0_i32_33 = arith.constant 0 : i32
    %109 = vector.broadcast %c0_i32_33 : i32 to vector<1x128xi32>
    %110 = arith.cmpi eq, %108, %109 : vector<1x128xi32>
    %c126_i32 = arith.constant 126 : i32
    %111 = tpu.dynamic_rotate %101 by %c126_i32 dim 1 : vector<1x128xf32>, i32 -> vector<1x128xf32>
    %c2_i32_34 = arith.constant 2 : i32
    %112 = tpu.dynamic_rotate %101 by %c2_i32_34 dim 1 : vector<1x128xf32>, i32 -> vector<1x128xf32>
    %113 = arith.select %110, %111, %112 : vector<1x128xi1>, vector<1x128xf32>
    %c126_i32_35 = arith.constant 126 : i32
    %114 = tpu.dynamic_rotate %106 by %c126_i32_35 dim 1 : vector<1x128xf32>, i32 -> vector<1x128xf32>
    %c2_i32_36 = arith.constant 2 : i32
    %115 = tpu.dynamic_rotate %106 by %c2_i32_36 dim 1 : vector<1x128xf32>, i32 -> vector<1x128xf32>
    %116 = arith.select %110, %114, %115 : vector<1x128xi1>, vector<1x128xf32>
    %117 = arith.addf %101, %113 : vector<1x128xf32>
    %118 = arith.subf %113, %101 : vector<1x128xf32>
    %119 = arith.select %110, %117, %118 : vector<1x128xi1>, vector<1x128xf32>
    %cst_37 = arith.constant 0.707106769 : f32
    %120 = vector.broadcast %cst_37 : f32 to vector<1x128xf32>
    %121 = arith.mulf %119, %120 : vector<1x128xf32>
    %122 = arith.addf %106, %116 : vector<1x128xf32>
    %123 = arith.subf %116, %106 : vector<1x128xf32>
    %124 = arith.select %110, %122, %123 : vector<1x128xi1>, vector<1x128xf32>
    %cst_38 = arith.constant 0.707106769 : f32
    %125 = vector.broadcast %cst_38 : f32 to vector<1x128xf32>
    %126 = arith.mulf %124, %125 : vector<1x128xf32>
    %c1_i32 = arith.constant 1 : i32
    %127 = vector.broadcast %c1_i32 : i32 to vector<1x128xi32>
    %128 = arith.andi %0, %127 : vector<1x128xi32>
    %c0_i32_39 = arith.constant 0 : i32
    %129 = vector.broadcast %c0_i32_39 : i32 to vector<1x128xi32>
    %130 = arith.cmpi eq, %128, %129 : vector<1x128xi32>
    %c127_i32 = arith.constant 127 : i32
    %131 = tpu.dynamic_rotate %121 by %c127_i32 dim 1 : vector<1x128xf32>, i32 -> vector<1x128xf32>
    %c1_i32_40 = arith.constant 1 : i32
    %132 = tpu.dynamic_rotate %121 by %c1_i32_40 dim 1 : vector<1x128xf32>, i32 -> vector<1x128xf32>
    %133 = arith.select %130, %131, %132 : vector<1x128xi1>, vector<1x128xf32>
    %c127_i32_41 = arith.constant 127 : i32
    %134 = tpu.dynamic_rotate %126 by %c127_i32_41 dim 1 : vector<1x128xf32>, i32 -> vector<1x128xf32>
    %c1_i32_42 = arith.constant 1 : i32
    %135 = tpu.dynamic_rotate %126 by %c1_i32_42 dim 1 : vector<1x128xf32>, i32 -> vector<1x128xf32>
    %136 = arith.select %130, %134, %135 : vector<1x128xi1>, vector<1x128xf32>
    %137 = arith.addf %121, %133 : vector<1x128xf32>
    %138 = arith.subf %133, %121 : vector<1x128xf32>
    %139 = arith.select %130, %137, %138 : vector<1x128xi1>, vector<1x128xf32>
    %cst_43 = arith.constant 0.707106769 : f32
    %140 = vector.broadcast %cst_43 : f32 to vector<1x128xf32>
    %141 = arith.mulf %139, %140 : vector<1x128xf32>
    %142 = arith.addf %126, %136 : vector<1x128xf32>
    %143 = arith.subf %136, %126 : vector<1x128xf32>
    %144 = arith.select %130, %142, %143 : vector<1x128xi1>, vector<1x128xf32>
    %cst_44 = arith.constant 0.707106769 : f32
    %145 = vector.broadcast %cst_44 : f32 to vector<1x128xf32>
    %146 = arith.mulf %144, %145 : vector<1x128xf32>
    %c32_i32_45 = arith.constant 32 : i32
    %147 = vector.broadcast %c32_i32_45 : i32 to vector<1x128xi32>
    %148 = arith.andi %0, %147 : vector<1x128xi32>
    %c0_i32_46 = arith.constant 0 : i32
    %149 = vector.broadcast %c0_i32_46 : i32 to vector<1x128xi32>
    %150 = arith.cmpi eq, %148, %149 : vector<1x128xi32>
    %c64_i32_47 = arith.constant 64 : i32
    %151 = vector.broadcast %c64_i32_47 : i32 to vector<1x128xi32>
    %152 = arith.andi %0, %151 : vector<1x128xi32>
    %c0_i32_48 = arith.constant 0 : i32
    %153 = vector.broadcast %c0_i32_48 : i32 to vector<1x128xi32>
    %154 = arith.cmpi ne, %152, %153 : vector<1x128xi32>
    %c96_i32_49 = arith.constant 96 : i32
    %155 = tpu.dynamic_rotate %141 by %c96_i32_49 dim 1 : vector<1x128xf32>, i32 -> vector<1x128xf32>
    %c32_i32_50 = arith.constant 32 : i32
    %156 = tpu.dynamic_rotate %141 by %c32_i32_50 dim 1 : vector<1x128xf32>, i32 -> vector<1x128xf32>
    %157 = arith.select %150, %155, %156 : vector<1x128xi1>, vector<1x128xf32>
    %c96_i32_51 = arith.constant 96 : i32
    %158 = tpu.dynamic_rotate %146 by %c96_i32_51 dim 1 : vector<1x128xf32>, i32 -> vector<1x128xf32>
    %c32_i32_52 = arith.constant 32 : i32
    %159 = tpu.dynamic_rotate %146 by %c32_i32_52 dim 1 : vector<1x128xf32>, i32 -> vector<1x128xf32>
    %160 = arith.select %150, %158, %159 : vector<1x128xi1>, vector<1x128xf32>
    %161 = arith.select %154, %157, %141 : vector<1x128xi1>, vector<1x128xf32>
    %162 = arith.select %154, %160, %146 : vector<1x128xi1>, vector<1x128xf32>
    %c16_i32_53 = arith.constant 16 : i32
    %163 = vector.broadcast %c16_i32_53 : i32 to vector<1x128xi32>
    %164 = arith.andi %0, %163 : vector<1x128xi32>
    %c0_i32_54 = arith.constant 0 : i32
    %165 = vector.broadcast %c0_i32_54 : i32 to vector<1x128xi32>
    %166 = arith.cmpi eq, %164, %165 : vector<1x128xi32>
    %c32_i32_55 = arith.constant 32 : i32
    %167 = vector.broadcast %c32_i32_55 : i32 to vector<1x128xi32>
    %168 = arith.andi %0, %167 : vector<1x128xi32>
    %c0_i32_56 = arith.constant 0 : i32
    %169 = vector.broadcast %c0_i32_56 : i32 to vector<1x128xi32>
    %170 = arith.cmpi ne, %168, %169 : vector<1x128xi32>
    %c112_i32_57 = arith.constant 112 : i32
    %171 = tpu.dynamic_rotate %161 by %c112_i32_57 dim 1 : vector<1x128xf32>, i32 -> vector<1x128xf32>
    %c16_i32_58 = arith.constant 16 : i32
    %172 = tpu.dynamic_rotate %161 by %c16_i32_58 dim 1 : vector<1x128xf32>, i32 -> vector<1x128xf32>
    %173 = arith.select %166, %171, %172 : vector<1x128xi1>, vector<1x128xf32>
    %c112_i32_59 = arith.constant 112 : i32
    %174 = tpu.dynamic_rotate %162 by %c112_i32_59 dim 1 : vector<1x128xf32>, i32 -> vector<1x128xf32>
    %c16_i32_60 = arith.constant 16 : i32
    %175 = tpu.dynamic_rotate %162 by %c16_i32_60 dim 1 : vector<1x128xf32>, i32 -> vector<1x128xf32>
    %176 = arith.select %166, %174, %175 : vector<1x128xi1>, vector<1x128xf32>
    %177 = arith.select %170, %173, %161 : vector<1x128xi1>, vector<1x128xf32>
    %178 = arith.select %170, %176, %162 : vector<1x128xi1>, vector<1x128xf32>
    %c8_i32_61 = arith.constant 8 : i32
    %179 = vector.broadcast %c8_i32_61 : i32 to vector<1x128xi32>
    %180 = arith.andi %0, %179 : vector<1x128xi32>
    %c0_i32_62 = arith.constant 0 : i32
    %181 = vector.broadcast %c0_i32_62 : i32 to vector<1x128xi32>
    %182 = arith.cmpi eq, %180, %181 : vector<1x128xi32>
    %c16_i32_63 = arith.constant 16 : i32
    %183 = vector.broadcast %c16_i32_63 : i32 to vector<1x128xi32>
    %184 = arith.andi %0, %183 : vector<1x128xi32>
    %c0_i32_64 = arith.constant 0 : i32
    %185 = vector.broadcast %c0_i32_64 : i32 to vector<1x128xi32>
    %186 = arith.cmpi ne, %184, %185 : vector<1x128xi32>
    %c120_i32_65 = arith.constant 120 : i32
    %187 = tpu.dynamic_rotate %177 by %c120_i32_65 dim 1 : vector<1x128xf32>, i32 -> vector<1x128xf32>
    %c8_i32_66 = arith.constant 8 : i32
    %188 = tpu.dynamic_rotate %177 by %c8_i32_66 dim 1 : vector<1x128xf32>, i32 -> vector<1x128xf32>
    %189 = arith.select %182, %187, %188 : vector<1x128xi1>, vector<1x128xf32>
    %c120_i32_67 = arith.constant 120 : i32
    %190 = tpu.dynamic_rotate %178 by %c120_i32_67 dim 1 : vector<1x128xf32>, i32 -> vector<1x128xf32>
    %c8_i32_68 = arith.constant 8 : i32
    %191 = tpu.dynamic_rotate %178 by %c8_i32_68 dim 1 : vector<1x128xf32>, i32 -> vector<1x128xf32>
    %192 = arith.select %182, %190, %191 : vector<1x128xi1>, vector<1x128xf32>
    %193 = arith.select %186, %189, %177 : vector<1x128xi1>, vector<1x128xf32>
    %194 = arith.select %186, %192, %178 : vector<1x128xi1>, vector<1x128xf32>
    %c4_i32_69 = arith.constant 4 : i32
    %195 = vector.broadcast %c4_i32_69 : i32 to vector<1x128xi32>
    %196 = arith.andi %0, %195 : vector<1x128xi32>
    %c0_i32_70 = arith.constant 0 : i32
    %197 = vector.broadcast %c0_i32_70 : i32 to vector<1x128xi32>
    %198 = arith.cmpi eq, %196, %197 : vector<1x128xi32>
    %c8_i32_71 = arith.constant 8 : i32
    %199 = vector.broadcast %c8_i32_71 : i32 to vector<1x128xi32>
    %200 = arith.andi %0, %199 : vector<1x128xi32>
    %c0_i32_72 = arith.constant 0 : i32
    %201 = vector.broadcast %c0_i32_72 : i32 to vector<1x128xi32>
    %202 = arith.cmpi ne, %200, %201 : vector<1x128xi32>
    %c124_i32_73 = arith.constant 124 : i32
    %203 = tpu.dynamic_rotate %193 by %c124_i32_73 dim 1 : vector<1x128xf32>, i32 -> vector<1x128xf32>
    %c4_i32_74 = arith.constant 4 : i32
    %204 = tpu.dynamic_rotate %193 by %c4_i32_74 dim 1 : vector<1x128xf32>, i32 -> vector<1x128xf32>
    %205 = arith.select %198, %203, %204 : vector<1x128xi1>, vector<1x128xf32>
    %c124_i32_75 = arith.constant 124 : i32
    %206 = tpu.dynamic_rotate %194 by %c124_i32_75 dim 1 : vector<1x128xf32>, i32 -> vector<1x128xf32>
    %c4_i32_76 = arith.constant 4 : i32
    %207 = tpu.dynamic_rotate %194 by %c4_i32_76 dim 1 : vector<1x128xf32>, i32 -> vector<1x128xf32>
    %208 = arith.select %198, %206, %207 : vector<1x128xi1>, vector<1x128xf32>
    %209 = arith.select %202, %205, %193 : vector<1x128xi1>, vector<1x128xf32>
    %210 = arith.select %202, %208, %194 : vector<1x128xi1>, vector<1x128xf32>
    %c2_i32_77 = arith.constant 2 : i32
    %211 = vector.broadcast %c2_i32_77 : i32 to vector<1x128xi32>
    %212 = arith.andi %0, %211 : vector<1x128xi32>
    %c0_i32_78 = arith.constant 0 : i32
    %213 = vector.broadcast %c0_i32_78 : i32 to vector<1x128xi32>
    %214 = arith.cmpi eq, %212, %213 : vector<1x128xi32>
    %c4_i32_79 = arith.constant 4 : i32
    %215 = vector.broadcast %c4_i32_79 : i32 to vector<1x128xi32>
    %216 = arith.andi %0, %215 : vector<1x128xi32>
    %c0_i32_80 = arith.constant 0 : i32
    %217 = vector.broadcast %c0_i32_80 : i32 to vector<1x128xi32>
    %218 = arith.cmpi ne, %216, %217 : vector<1x128xi32>
    %c126_i32_81 = arith.constant 126 : i32
    %219 = tpu.dynamic_rotate %209 by %c126_i32_81 dim 1 : vector<1x128xf32>, i32 -> vector<1x128xf32>
    %c2_i32_82 = arith.constant 2 : i32
    %220 = tpu.dynamic_rotate %209 by %c2_i32_82 dim 1 : vector<1x128xf32>, i32 -> vector<1x128xf32>
    %221 = arith.select %214, %219, %220 : vector<1x128xi1>, vector<1x128xf32>
    %c126_i32_83 = arith.constant 126 : i32
    %222 = tpu.dynamic_rotate %210 by %c126_i32_83 dim 1 : vector<1x128xf32>, i32 -> vector<1x128xf32>
    %c2_i32_84 = arith.constant 2 : i32
    %223 = tpu.dynamic_rotate %210 by %c2_i32_84 dim 1 : vector<1x128xf32>, i32 -> vector<1x128xf32>
    %224 = arith.select %214, %222, %223 : vector<1x128xi1>, vector<1x128xf32>
    %225 = arith.select %218, %221, %209 : vector<1x128xi1>, vector<1x128xf32>
    %226 = arith.select %218, %224, %210 : vector<1x128xi1>, vector<1x128xf32>
    %c1_i32_85 = arith.constant 1 : i32
    %227 = vector.broadcast %c1_i32_85 : i32 to vector<1x128xi32>
    %228 = arith.andi %0, %227 : vector<1x128xi32>
    %c0_i32_86 = arith.constant 0 : i32
    %229 = vector.broadcast %c0_i32_86 : i32 to vector<1x128xi32>
    %230 = arith.cmpi eq, %228, %229 : vector<1x128xi32>
    %c2_i32_87 = arith.constant 2 : i32
    %231 = vector.broadcast %c2_i32_87 : i32 to vector<1x128xi32>
    %232 = arith.andi %0, %231 : vector<1x128xi32>
    %c0_i32_88 = arith.constant 0 : i32
    %233 = vector.broadcast %c0_i32_88 : i32 to vector<1x128xi32>
    %234 = arith.cmpi ne, %232, %233 : vector<1x128xi32>
    %c127_i32_89 = arith.constant 127 : i32
    %235 = tpu.dynamic_rotate %225 by %c127_i32_89 dim 1 : vector<1x128xf32>, i32 -> vector<1x128xf32>
    %c1_i32_90 = arith.constant 1 : i32
    %236 = tpu.dynamic_rotate %225 by %c1_i32_90 dim 1 : vector<1x128xf32>, i32 -> vector<1x128xf32>
    %237 = arith.select %230, %235, %236 : vector<1x128xi1>, vector<1x128xf32>
    %c127_i32_91 = arith.constant 127 : i32
    %238 = tpu.dynamic_rotate %226 by %c127_i32_91 dim 1 : vector<1x128xf32>, i32 -> vector<1x128xf32>
    %c1_i32_92 = arith.constant 1 : i32
    %239 = tpu.dynamic_rotate %226 by %c1_i32_92 dim 1 : vector<1x128xf32>, i32 -> vector<1x128xf32>
    %240 = arith.select %230, %238, %239 : vector<1x128xi1>, vector<1x128xf32>
    %241 = arith.select %234, %237, %225 : vector<1x128xi1>, vector<1x128xf32>
    %242 = arith.select %234, %240, %226 : vector<1x128xi1>, vector<1x128xf32>
    %c16_i32_93 = arith.constant 16 : i32
    %243 = vector.broadcast %c16_i32_93 : i32 to vector<1x128xi32>
    %244 = arith.andi %0, %243 : vector<1x128xi32>
    %c0_i32_94 = arith.constant 0 : i32
    %245 = vector.broadcast %c0_i32_94 : i32 to vector<1x128xi32>
    %246 = arith.cmpi eq, %244, %245 : vector<1x128xi32>
    %c112_i32_95 = arith.constant 112 : i32
    %247 = tpu.dynamic_rotate %241 by %c112_i32_95 dim 1 : vector<1x128xf32>, i32 -> vector<1x128xf32>
    %c16_i32_96 = arith.constant 16 : i32
    %248 = tpu.dynamic_rotate %241 by %c16_i32_96 dim 1 : vector<1x128xf32>, i32 -> vector<1x128xf32>
    %249 = arith.select %246, %247, %248 : vector<1x128xi1>, vector<1x128xf32>
    %c112_i32_97 = arith.constant 112 : i32
    %250 = tpu.dynamic_rotate %242 by %c112_i32_97 dim 1 : vector<1x128xf32>, i32 -> vector<1x128xf32>
    %c16_i32_98 = arith.constant 16 : i32
    %251 = tpu.dynamic_rotate %242 by %c16_i32_98 dim 1 : vector<1x128xf32>, i32 -> vector<1x128xf32>
    %252 = arith.select %246, %250, %251 : vector<1x128xi1>, vector<1x128xf32>
    %c4_i32_99 = arith.constant 4 : i32
    %253 = vector.broadcast %c4_i32_99 : i32 to vector<1x128xi32>
    %254 = arith.andi %0, %253 : vector<1x128xi32>
    %c0_i32_100 = arith.constant 0 : i32
    %255 = vector.broadcast %c0_i32_100 : i32 to vector<1x128xi32>
    %256 = arith.cmpi eq, %254, %255 : vector<1x128xi32>
    %c124_i32_101 = arith.constant 124 : i32
    %257 = tpu.dynamic_rotate %249 by %c124_i32_101 dim 1 : vector<1x128xf32>, i32 -> vector<1x128xf32>
    %c4_i32_102 = arith.constant 4 : i32
    %258 = tpu.dynamic_rotate %249 by %c4_i32_102 dim 1 : vector<1x128xf32>, i32 -> vector<1x128xf32>
    %259 = arith.select %256, %257, %258 : vector<1x128xi1>, vector<1x128xf32>
    %c124_i32_103 = arith.constant 124 : i32
    %260 = tpu.dynamic_rotate %252 by %c124_i32_103 dim 1 : vector<1x128xf32>, i32 -> vector<1x128xf32>
    %c4_i32_104 = arith.constant 4 : i32
    %261 = tpu.dynamic_rotate %252 by %c4_i32_104 dim 1 : vector<1x128xf32>, i32 -> vector<1x128xf32>
    %262 = arith.select %256, %260, %261 : vector<1x128xi1>, vector<1x128xf32>
    %cst_105 = arith.constant 1.000000e+00 : f32
    %cst_106 = arith.constant -1.000000e+00 : f32
    %263 = vector.broadcast %cst_105 : f32 to vector<1x128xf32>
    %264 = vector.broadcast %cst_106 : f32 to vector<1x128xf32>
    %265 = arith.select %256, %263, %264 : vector<1x128xi1>, vector<1x128xf32>
    %266 = arith.mulf %265, %262 : vector<1x128xf32>
    %cst_107 = arith.constant 0.000000e+00 : f32
    %267 = vector.broadcast %cst_107 : f32 to vector<1x128xf32>
    %268 = arith.subf %267, %265 : vector<1x128xf32>
    %269 = arith.mulf %268, %259 : vector<1x128xf32>
    %c2_i32_108 = arith.constant 2 : i32
    %270 = vector.broadcast %c2_i32_108 : i32 to vector<1x128xi32>
    %271 = arith.andi %0, %270 : vector<1x128xi32>
    %c0_i32_109 = arith.constant 0 : i32
    %272 = vector.broadcast %c0_i32_109 : i32 to vector<1x128xi32>
    %273 = arith.cmpi ne, %271, %272 : vector<1x128xi32>
    %cst_110 = arith.constant 0.000000e+00 : f32
    %274 = vector.broadcast %cst_110 : f32 to vector<1x128xf32>
    %275 = arith.subf %274, %266 : vector<1x128xf32>
    %276 = arith.select %273, %275, %266 : vector<1x128xi1>, vector<1x128xf32>
    %cst_111 = arith.constant 0.000000e+00 : f32
    %277 = vector.broadcast %cst_111 : f32 to vector<1x128xf32>
    %278 = arith.subf %277, %269 : vector<1x128xf32>
    %279 = arith.select %273, %278, %269 : vector<1x128xi1>, vector<1x128xf32>
    %c32_i32_112 = arith.constant 32 : i32
    %280 = vector.broadcast %c32_i32_112 : i32 to vector<1x128xi32>
    %281 = arith.andi %0, %280 : vector<1x128xi32>
    %c0_i32_113 = arith.constant 0 : i32
    %282 = vector.broadcast %c0_i32_113 : i32 to vector<1x128xi32>
    %283 = arith.cmpi ne, %281, %282 : vector<1x128xi32>
    %c8_i32_114 = arith.constant 8 : i32
    %284 = vector.broadcast %c8_i32_114 : i32 to vector<1x128xi32>
    %285 = arith.andi %0, %284 : vector<1x128xi32>
    %c0_i32_115 = arith.constant 0 : i32
    %286 = vector.broadcast %c0_i32_115 : i32 to vector<1x128xi32>
    %287 = arith.cmpi ne, %285, %286 : vector<1x128xi32>
    %288 = arith.andi %283, %287 : vector<1x128xi1>
    %cst_116 = arith.constant 0.000000e+00 : f32
    %289 = vector.broadcast %cst_116 : f32 to vector<1x128xf32>
    %290 = arith.subf %289, %276 : vector<1x128xf32>
    %291 = arith.select %288, %290, %276 : vector<1x128xi1>, vector<1x128xf32>
    %cst_117 = arith.constant 0.000000e+00 : f32
    %292 = vector.broadcast %cst_117 : f32 to vector<1x128xf32>
    %293 = arith.subf %292, %279 : vector<1x128xf32>
    %294 = arith.select %288, %293, %279 : vector<1x128xi1>, vector<1x128xf32>
    %c64_i32_118 = arith.constant 64 : i32
    %295 = vector.broadcast %c64_i32_118 : i32 to vector<1x128xi32>
    %296 = arith.andi %0, %295 : vector<1x128xi32>
    %c0_i32_119 = arith.constant 0 : i32
    %297 = vector.broadcast %c0_i32_119 : i32 to vector<1x128xi32>
    %298 = arith.cmpi eq, %296, %297 : vector<1x128xi32>
    %c0 = arith.constant 0 : index
    %299 = memref.load %arg0[%c0] : memref<60xf32, #tpu.memory_space<smem>>
    %c1 = arith.constant 1 : index
    %300 = memref.load %arg0[%c1] : memref<60xf32, #tpu.memory_space<smem>>
    %c64_i32_120 = arith.constant 64 : i32
    %301 = tpu.dynamic_rotate %291 by %c64_i32_120 dim 1 : vector<1x128xf32>, i32 -> vector<1x128xf32>
    %c64_i32_121 = arith.constant 64 : i32
    %302 = tpu.dynamic_rotate %291 by %c64_i32_121 dim 1 : vector<1x128xf32>, i32 -> vector<1x128xf32>
    %303 = arith.select %298, %301, %302 : vector<1x128xi1>, vector<1x128xf32>
    %c64_i32_122 = arith.constant 64 : i32
    %304 = tpu.dynamic_rotate %294 by %c64_i32_122 dim 1 : vector<1x128xf32>, i32 -> vector<1x128xf32>
    %c64_i32_123 = arith.constant 64 : i32
    %305 = tpu.dynamic_rotate %294 by %c64_i32_123 dim 1 : vector<1x128xf32>, i32 -> vector<1x128xf32>
    %306 = arith.select %298, %304, %305 : vector<1x128xi1>, vector<1x128xf32>
    %307 = vector.broadcast %299 : f32 to vector<1x128xf32>
    %308 = arith.mulf %307, %291 : vector<1x128xf32>
    %309 = vector.broadcast %300 : f32 to vector<1x128xf32>
    %310 = arith.mulf %309, %306 : vector<1x128xf32>
    %311 = arith.addf %308, %310 : vector<1x128xf32>
    %312 = vector.broadcast %299 : f32 to vector<1x128xf32>
    %313 = arith.mulf %312, %294 : vector<1x128xf32>
    %314 = vector.broadcast %300 : f32 to vector<1x128xf32>
    %315 = arith.mulf %314, %303 : vector<1x128xf32>
    %316 = arith.subf %313, %315 : vector<1x128xf32>
    %c1_i32_124 = arith.constant 1 : i32
    %317 = vector.broadcast %c1_i32_124 : i32 to vector<1x128xi32>
    %318 = arith.andi %0, %317 : vector<1x128xi32>
    %c0_i32_125 = arith.constant 0 : i32
    %319 = vector.broadcast %c0_i32_125 : i32 to vector<1x128xi32>
    %320 = arith.cmpi eq, %318, %319 : vector<1x128xi32>
    %c2 = arith.constant 2 : index
    %321 = memref.load %arg0[%c2] : memref<60xf32, #tpu.memory_space<smem>>
    %c3 = arith.constant 3 : index
    %322 = memref.load %arg0[%c3] : memref<60xf32, #tpu.memory_space<smem>>
    %cst_126 = arith.constant 1.000000e+00 : f32
    %cst_127 = arith.constant -1.000000e+00 : f32
    %323 = vector.broadcast %cst_126 : f32 to vector<1x128xf32>
    %324 = vector.broadcast %cst_127 : f32 to vector<1x128xf32>
    %325 = arith.select %320, %323, %324 : vector<1x128xi1>, vector<1x128xf32>
    %326 = vector.broadcast %321 : f32 to vector<1x128xf32>
    %327 = arith.mulf %326, %311 : vector<1x128xf32>
    %328 = vector.broadcast %322 : f32 to vector<1x128xf32>
    %329 = arith.mulf %325, %328 : vector<1x128xf32>
    %330 = arith.mulf %329, %316 : vector<1x128xf32>
    %331 = arith.addf %327, %330 : vector<1x128xf32>
    %332 = vector.broadcast %321 : f32 to vector<1x128xf32>
    %333 = arith.mulf %332, %316 : vector<1x128xf32>
    %334 = vector.broadcast %322 : f32 to vector<1x128xf32>
    %335 = arith.mulf %325, %334 : vector<1x128xf32>
    %336 = arith.mulf %335, %311 : vector<1x128xf32>
    %337 = arith.subf %333, %336 : vector<1x128xf32>
    %c64_i32_128 = arith.constant 64 : i32
    %338 = vector.broadcast %c64_i32_128 : i32 to vector<1x128xi32>
    %339 = arith.andi %0, %338 : vector<1x128xi32>
    %c0_i32_129 = arith.constant 0 : i32
    %340 = vector.broadcast %c0_i32_129 : i32 to vector<1x128xi32>
    %341 = arith.cmpi eq, %339, %340 : vector<1x128xi32>
    %c4 = arith.constant 4 : index
    %342 = memref.load %arg0[%c4] : memref<60xf32, #tpu.memory_space<smem>>
    %c5 = arith.constant 5 : index
    %343 = memref.load %arg0[%c5] : memref<60xf32, #tpu.memory_space<smem>>
    %c64_i32_130 = arith.constant 64 : i32
    %344 = tpu.dynamic_rotate %331 by %c64_i32_130 dim 1 : vector<1x128xf32>, i32 -> vector<1x128xf32>
    %c64_i32_131 = arith.constant 64 : i32
    %345 = tpu.dynamic_rotate %331 by %c64_i32_131 dim 1 : vector<1x128xf32>, i32 -> vector<1x128xf32>
    %346 = arith.select %341, %344, %345 : vector<1x128xi1>, vector<1x128xf32>
    %c64_i32_132 = arith.constant 64 : i32
    %347 = tpu.dynamic_rotate %337 by %c64_i32_132 dim 1 : vector<1x128xf32>, i32 -> vector<1x128xf32>
    %c64_i32_133 = arith.constant 64 : i32
    %348 = tpu.dynamic_rotate %337 by %c64_i32_133 dim 1 : vector<1x128xf32>, i32 -> vector<1x128xf32>
    %349 = arith.select %341, %347, %348 : vector<1x128xi1>, vector<1x128xf32>
    %350 = vector.broadcast %342 : f32 to vector<1x128xf32>
    %351 = arith.mulf %350, %331 : vector<1x128xf32>
    %352 = vector.broadcast %343 : f32 to vector<1x128xf32>
    %353 = arith.mulf %352, %349 : vector<1x128xf32>
    %354 = arith.addf %351, %353 : vector<1x128xf32>
    %355 = vector.broadcast %342 : f32 to vector<1x128xf32>
    %356 = arith.mulf %355, %337 : vector<1x128xf32>
    %357 = vector.broadcast %343 : f32 to vector<1x128xf32>
    %358 = arith.mulf %357, %346 : vector<1x128xf32>
    %359 = arith.subf %356, %358 : vector<1x128xf32>
    %c32_i32_134 = arith.constant 32 : i32
    %360 = vector.broadcast %c32_i32_134 : i32 to vector<1x128xi32>
    %361 = arith.andi %0, %360 : vector<1x128xi32>
    %c0_i32_135 = arith.constant 0 : i32
    %362 = vector.broadcast %c0_i32_135 : i32 to vector<1x128xi32>
    %363 = arith.cmpi eq, %361, %362 : vector<1x128xi32>
    %c6 = arith.constant 6 : index
    %364 = memref.load %arg0[%c6] : memref<60xf32, #tpu.memory_space<smem>>
    %c7 = arith.constant 7 : index
    %365 = memref.load %arg0[%c7] : memref<60xf32, #tpu.memory_space<smem>>
    %c96_i32_136 = arith.constant 96 : i32
    %366 = tpu.dynamic_rotate %354 by %c96_i32_136 dim 1 : vector<1x128xf32>, i32 -> vector<1x128xf32>
    %c32_i32_137 = arith.constant 32 : i32
    %367 = tpu.dynamic_rotate %354 by %c32_i32_137 dim 1 : vector<1x128xf32>, i32 -> vector<1x128xf32>
    %368 = arith.select %363, %366, %367 : vector<1x128xi1>, vector<1x128xf32>
    %c96_i32_138 = arith.constant 96 : i32
    %369 = tpu.dynamic_rotate %359 by %c96_i32_138 dim 1 : vector<1x128xf32>, i32 -> vector<1x128xf32>
    %c32_i32_139 = arith.constant 32 : i32
    %370 = tpu.dynamic_rotate %359 by %c32_i32_139 dim 1 : vector<1x128xf32>, i32 -> vector<1x128xf32>
    %371 = arith.select %363, %369, %370 : vector<1x128xi1>, vector<1x128xf32>
    %372 = vector.broadcast %364 : f32 to vector<1x128xf32>
    %373 = arith.mulf %372, %354 : vector<1x128xf32>
    %374 = vector.broadcast %365 : f32 to vector<1x128xf32>
    %375 = arith.mulf %374, %371 : vector<1x128xf32>
    %376 = arith.addf %373, %375 : vector<1x128xf32>
    %377 = vector.broadcast %364 : f32 to vector<1x128xf32>
    %378 = arith.mulf %377, %359 : vector<1x128xf32>
    %379 = vector.broadcast %365 : f32 to vector<1x128xf32>
    %380 = arith.mulf %379, %368 : vector<1x128xf32>
    %381 = arith.subf %378, %380 : vector<1x128xf32>
    %c16_i32_140 = arith.constant 16 : i32
    %382 = vector.broadcast %c16_i32_140 : i32 to vector<1x128xi32>
    %383 = arith.andi %0, %382 : vector<1x128xi32>
    %c0_i32_141 = arith.constant 0 : i32
    %384 = vector.broadcast %c0_i32_141 : i32 to vector<1x128xi32>
    %385 = arith.cmpi eq, %383, %384 : vector<1x128xi32>
    %c8 = arith.constant 8 : index
    %386 = memref.load %arg0[%c8] : memref<60xf32, #tpu.memory_space<smem>>
    %c9 = arith.constant 9 : index
    %387 = memref.load %arg0[%c9] : memref<60xf32, #tpu.memory_space<smem>>
    %c112_i32_142 = arith.constant 112 : i32
    %388 = tpu.dynamic_rotate %376 by %c112_i32_142 dim 1 : vector<1x128xf32>, i32 -> vector<1x128xf32>
    %c16_i32_143 = arith.constant 16 : i32
    %389 = tpu.dynamic_rotate %376 by %c16_i32_143 dim 1 : vector<1x128xf32>, i32 -> vector<1x128xf32>
    %390 = arith.select %385, %388, %389 : vector<1x128xi1>, vector<1x128xf32>
    %c112_i32_144 = arith.constant 112 : i32
    %391 = tpu.dynamic_rotate %381 by %c112_i32_144 dim 1 : vector<1x128xf32>, i32 -> vector<1x128xf32>
    %c16_i32_145 = arith.constant 16 : i32
    %392 = tpu.dynamic_rotate %381 by %c16_i32_145 dim 1 : vector<1x128xf32>, i32 -> vector<1x128xf32>
    %393 = arith.select %385, %391, %392 : vector<1x128xi1>, vector<1x128xf32>
    %394 = vector.broadcast %386 : f32 to vector<1x128xf32>
    %395 = arith.mulf %394, %376 : vector<1x128xf32>
    %396 = vector.broadcast %387 : f32 to vector<1x128xf32>
    %397 = arith.mulf %396, %393 : vector<1x128xf32>
    %398 = arith.addf %395, %397 : vector<1x128xf32>
    %399 = vector.broadcast %386 : f32 to vector<1x128xf32>
    %400 = arith.mulf %399, %381 : vector<1x128xf32>
    %401 = vector.broadcast %387 : f32 to vector<1x128xf32>
    %402 = arith.mulf %401, %390 : vector<1x128xf32>
    %403 = arith.subf %400, %402 : vector<1x128xf32>
    %c8_i32_146 = arith.constant 8 : i32
    %404 = vector.broadcast %c8_i32_146 : i32 to vector<1x128xi32>
    %405 = arith.andi %0, %404 : vector<1x128xi32>
    %c0_i32_147 = arith.constant 0 : i32
    %406 = vector.broadcast %c0_i32_147 : i32 to vector<1x128xi32>
    %407 = arith.cmpi eq, %405, %406 : vector<1x128xi32>
    %c10 = arith.constant 10 : index
    %408 = memref.load %arg0[%c10] : memref<60xf32, #tpu.memory_space<smem>>
    %c11 = arith.constant 11 : index
    %409 = memref.load %arg0[%c11] : memref<60xf32, #tpu.memory_space<smem>>
    %c120_i32_148 = arith.constant 120 : i32
    %410 = tpu.dynamic_rotate %398 by %c120_i32_148 dim 1 : vector<1x128xf32>, i32 -> vector<1x128xf32>
    %c8_i32_149 = arith.constant 8 : i32
    %411 = tpu.dynamic_rotate %398 by %c8_i32_149 dim 1 : vector<1x128xf32>, i32 -> vector<1x128xf32>
    %412 = arith.select %407, %410, %411 : vector<1x128xi1>, vector<1x128xf32>
    %c120_i32_150 = arith.constant 120 : i32
    %413 = tpu.dynamic_rotate %403 by %c120_i32_150 dim 1 : vector<1x128xf32>, i32 -> vector<1x128xf32>
    %c8_i32_151 = arith.constant 8 : i32
    %414 = tpu.dynamic_rotate %403 by %c8_i32_151 dim 1 : vector<1x128xf32>, i32 -> vector<1x128xf32>
    %415 = arith.select %407, %413, %414 : vector<1x128xi1>, vector<1x128xf32>
    %416 = vector.broadcast %408 : f32 to vector<1x128xf32>
    %417 = arith.mulf %416, %398 : vector<1x128xf32>
    %418 = vector.broadcast %409 : f32 to vector<1x128xf32>
    %419 = arith.mulf %418, %415 : vector<1x128xf32>
    %420 = arith.addf %417, %419 : vector<1x128xf32>
    %421 = vector.broadcast %408 : f32 to vector<1x128xf32>
    %422 = arith.mulf %421, %403 : vector<1x128xf32>
    %423 = vector.broadcast %409 : f32 to vector<1x128xf32>
    %424 = arith.mulf %423, %412 : vector<1x128xf32>
    %425 = arith.subf %422, %424 : vector<1x128xf32>
    %c4_i32_152 = arith.constant 4 : i32
    %426 = vector.broadcast %c4_i32_152 : i32 to vector<1x128xi32>
    %427 = arith.andi %0, %426 : vector<1x128xi32>
    %c0_i32_153 = arith.constant 0 : i32
    %428 = vector.broadcast %c0_i32_153 : i32 to vector<1x128xi32>
    %429 = arith.cmpi eq, %427, %428 : vector<1x128xi32>
    %c12 = arith.constant 12 : index
    %430 = memref.load %arg0[%c12] : memref<60xf32, #tpu.memory_space<smem>>
    %c13 = arith.constant 13 : index
    %431 = memref.load %arg0[%c13] : memref<60xf32, #tpu.memory_space<smem>>
    %c124_i32_154 = arith.constant 124 : i32
    %432 = tpu.dynamic_rotate %420 by %c124_i32_154 dim 1 : vector<1x128xf32>, i32 -> vector<1x128xf32>
    %c4_i32_155 = arith.constant 4 : i32
    %433 = tpu.dynamic_rotate %420 by %c4_i32_155 dim 1 : vector<1x128xf32>, i32 -> vector<1x128xf32>
    %434 = arith.select %429, %432, %433 : vector<1x128xi1>, vector<1x128xf32>
    %c124_i32_156 = arith.constant 124 : i32
    %435 = tpu.dynamic_rotate %425 by %c124_i32_156 dim 1 : vector<1x128xf32>, i32 -> vector<1x128xf32>
    %c4_i32_157 = arith.constant 4 : i32
    %436 = tpu.dynamic_rotate %425 by %c4_i32_157 dim 1 : vector<1x128xf32>, i32 -> vector<1x128xf32>
    %437 = arith.select %429, %435, %436 : vector<1x128xi1>, vector<1x128xf32>
    %438 = vector.broadcast %430 : f32 to vector<1x128xf32>
    %439 = arith.mulf %438, %420 : vector<1x128xf32>
    %440 = vector.broadcast %431 : f32 to vector<1x128xf32>
    %441 = arith.mulf %440, %437 : vector<1x128xf32>
    %442 = arith.addf %439, %441 : vector<1x128xf32>
    %443 = vector.broadcast %430 : f32 to vector<1x128xf32>
    %444 = arith.mulf %443, %425 : vector<1x128xf32>
    %445 = vector.broadcast %431 : f32 to vector<1x128xf32>
    %446 = arith.mulf %445, %434 : vector<1x128xf32>
    %447 = arith.subf %444, %446 : vector<1x128xf32>
    %c2_i32_158 = arith.constant 2 : i32
    %448 = vector.broadcast %c2_i32_158 : i32 to vector<1x128xi32>
    %449 = arith.andi %0, %448 : vector<1x128xi32>
    %c0_i32_159 = arith.constant 0 : i32
    %450 = vector.broadcast %c0_i32_159 : i32 to vector<1x128xi32>
    %451 = arith.cmpi eq, %449, %450 : vector<1x128xi32>
    %c14 = arith.constant 14 : index
    %452 = memref.load %arg0[%c14] : memref<60xf32, #tpu.memory_space<smem>>
    %c15 = arith.constant 15 : index
    %453 = memref.load %arg0[%c15] : memref<60xf32, #tpu.memory_space<smem>>
    %c126_i32_160 = arith.constant 126 : i32
    %454 = tpu.dynamic_rotate %442 by %c126_i32_160 dim 1 : vector<1x128xf32>, i32 -> vector<1x128xf32>
    %c2_i32_161 = arith.constant 2 : i32
    %455 = tpu.dynamic_rotate %442 by %c2_i32_161 dim 1 : vector<1x128xf32>, i32 -> vector<1x128xf32>
    %456 = arith.select %451, %454, %455 : vector<1x128xi1>, vector<1x128xf32>
    %c126_i32_162 = arith.constant 126 : i32
    %457 = tpu.dynamic_rotate %447 by %c126_i32_162 dim 1 : vector<1x128xf32>, i32 -> vector<1x128xf32>
    %c2_i32_163 = arith.constant 2 : i32
    %458 = tpu.dynamic_rotate %447 by %c2_i32_163 dim 1 : vector<1x128xf32>, i32 -> vector<1x128xf32>
    %459 = arith.select %451, %457, %458 : vector<1x128xi1>, vector<1x128xf32>
    %460 = vector.broadcast %452 : f32 to vector<1x128xf32>
    %461 = arith.mulf %460, %442 : vector<1x128xf32>
    %462 = vector.broadcast %453 : f32 to vector<1x128xf32>
    %463 = arith.mulf %462, %459 : vector<1x128xf32>
    %464 = arith.addf %461, %463 : vector<1x128xf32>
    %465 = vector.broadcast %452 : f32 to vector<1x128xf32>
    %466 = arith.mulf %465, %447 : vector<1x128xf32>
    %467 = vector.broadcast %453 : f32 to vector<1x128xf32>
    %468 = arith.mulf %467, %456 : vector<1x128xf32>
    %469 = arith.subf %466, %468 : vector<1x128xf32>
    %c1_i32_164 = arith.constant 1 : i32
    %470 = vector.broadcast %c1_i32_164 : i32 to vector<1x128xi32>
    %471 = arith.andi %0, %470 : vector<1x128xi32>
    %c0_i32_165 = arith.constant 0 : i32
    %472 = vector.broadcast %c0_i32_165 : i32 to vector<1x128xi32>
    %473 = arith.cmpi eq, %471, %472 : vector<1x128xi32>
    %c16 = arith.constant 16 : index
    %474 = memref.load %arg0[%c16] : memref<60xf32, #tpu.memory_space<smem>>
    %c17 = arith.constant 17 : index
    %475 = memref.load %arg0[%c17] : memref<60xf32, #tpu.memory_space<smem>>
    %c127_i32_166 = arith.constant 127 : i32
    %476 = tpu.dynamic_rotate %464 by %c127_i32_166 dim 1 : vector<1x128xf32>, i32 -> vector<1x128xf32>
    %c1_i32_167 = arith.constant 1 : i32
    %477 = tpu.dynamic_rotate %464 by %c1_i32_167 dim 1 : vector<1x128xf32>, i32 -> vector<1x128xf32>
    %478 = arith.select %473, %476, %477 : vector<1x128xi1>, vector<1x128xf32>
    %c127_i32_168 = arith.constant 127 : i32
    %479 = tpu.dynamic_rotate %469 by %c127_i32_168 dim 1 : vector<1x128xf32>, i32 -> vector<1x128xf32>
    %c1_i32_169 = arith.constant 1 : i32
    %480 = tpu.dynamic_rotate %469 by %c1_i32_169 dim 1 : vector<1x128xf32>, i32 -> vector<1x128xf32>
    %481 = arith.select %473, %479, %480 : vector<1x128xi1>, vector<1x128xf32>
    %482 = vector.broadcast %474 : f32 to vector<1x128xf32>
    %483 = arith.mulf %482, %464 : vector<1x128xf32>
    %484 = vector.broadcast %475 : f32 to vector<1x128xf32>
    %485 = arith.mulf %484, %481 : vector<1x128xf32>
    %486 = arith.addf %483, %485 : vector<1x128xf32>
    %487 = vector.broadcast %474 : f32 to vector<1x128xf32>
    %488 = arith.mulf %487, %469 : vector<1x128xf32>
    %489 = vector.broadcast %475 : f32 to vector<1x128xf32>
    %490 = arith.mulf %489, %478 : vector<1x128xf32>
    %491 = arith.subf %488, %490 : vector<1x128xf32>
    %c64_i32_170 = arith.constant 64 : i32
    %492 = vector.broadcast %c64_i32_170 : i32 to vector<1x128xi32>
    %493 = arith.andi %0, %492 : vector<1x128xi32>
    %c0_i32_171 = arith.constant 0 : i32
    %494 = vector.broadcast %c0_i32_171 : i32 to vector<1x128xi32>
    %495 = arith.cmpi eq, %493, %494 : vector<1x128xi32>
    %c18 = arith.constant 18 : index
    %496 = memref.load %arg0[%c18] : memref<60xf32, #tpu.memory_space<smem>>
    %c19 = arith.constant 19 : index
    %497 = memref.load %arg0[%c19] : memref<60xf32, #tpu.memory_space<smem>>
    %cst_172 = arith.constant 1.000000e+00 : f32
    %cst_173 = arith.constant -1.000000e+00 : f32
    %498 = vector.broadcast %cst_172 : f32 to vector<1x128xf32>
    %499 = vector.broadcast %cst_173 : f32 to vector<1x128xf32>
    %500 = arith.select %495, %498, %499 : vector<1x128xi1>, vector<1x128xf32>
    %501 = vector.broadcast %496 : f32 to vector<1x128xf32>
    %502 = arith.mulf %501, %486 : vector<1x128xf32>
    %503 = vector.broadcast %497 : f32 to vector<1x128xf32>
    %504 = arith.mulf %500, %503 : vector<1x128xf32>
    %505 = arith.mulf %504, %491 : vector<1x128xf32>
    %506 = arith.addf %502, %505 : vector<1x128xf32>
    %507 = vector.broadcast %496 : f32 to vector<1x128xf32>
    %508 = arith.mulf %507, %491 : vector<1x128xf32>
    %509 = vector.broadcast %497 : f32 to vector<1x128xf32>
    %510 = arith.mulf %500, %509 : vector<1x128xf32>
    %511 = arith.mulf %510, %486 : vector<1x128xf32>
    %512 = arith.subf %508, %511 : vector<1x128xf32>
    %c32_i32_174 = arith.constant 32 : i32
    %513 = vector.broadcast %c32_i32_174 : i32 to vector<1x128xi32>
    %514 = arith.andi %0, %513 : vector<1x128xi32>
    %c0_i32_175 = arith.constant 0 : i32
    %515 = vector.broadcast %c0_i32_175 : i32 to vector<1x128xi32>
    %516 = arith.cmpi eq, %514, %515 : vector<1x128xi32>
    %c20 = arith.constant 20 : index
    %517 = memref.load %arg0[%c20] : memref<60xf32, #tpu.memory_space<smem>>
    %c21 = arith.constant 21 : index
    %518 = memref.load %arg0[%c21] : memref<60xf32, #tpu.memory_space<smem>>
    %cst_176 = arith.constant 1.000000e+00 : f32
    %cst_177 = arith.constant -1.000000e+00 : f32
    %519 = vector.broadcast %cst_176 : f32 to vector<1x128xf32>
    %520 = vector.broadcast %cst_177 : f32 to vector<1x128xf32>
    %521 = arith.select %516, %519, %520 : vector<1x128xi1>, vector<1x128xf32>
    %522 = vector.broadcast %517 : f32 to vector<1x128xf32>
    %523 = arith.mulf %522, %506 : vector<1x128xf32>
    %524 = vector.broadcast %518 : f32 to vector<1x128xf32>
    %525 = arith.mulf %521, %524 : vector<1x128xf32>
    %526 = arith.mulf %525, %512 : vector<1x128xf32>
    %527 = arith.addf %523, %526 : vector<1x128xf32>
    %528 = vector.broadcast %517 : f32 to vector<1x128xf32>
    %529 = arith.mulf %528, %512 : vector<1x128xf32>
    %530 = vector.broadcast %518 : f32 to vector<1x128xf32>
    %531 = arith.mulf %521, %530 : vector<1x128xf32>
    %532 = arith.mulf %531, %506 : vector<1x128xf32>
    %533 = arith.subf %529, %532 : vector<1x128xf32>
    %c16_i32_178 = arith.constant 16 : i32
    %534 = vector.broadcast %c16_i32_178 : i32 to vector<1x128xi32>
    %535 = arith.andi %0, %534 : vector<1x128xi32>
    %c0_i32_179 = arith.constant 0 : i32
    %536 = vector.broadcast %c0_i32_179 : i32 to vector<1x128xi32>
    %537 = arith.cmpi eq, %535, %536 : vector<1x128xi32>
    %c22 = arith.constant 22 : index
    %538 = memref.load %arg0[%c22] : memref<60xf32, #tpu.memory_space<smem>>
    %c23 = arith.constant 23 : index
    %539 = memref.load %arg0[%c23] : memref<60xf32, #tpu.memory_space<smem>>
    %cst_180 = arith.constant 1.000000e+00 : f32
    %cst_181 = arith.constant -1.000000e+00 : f32
    %540 = vector.broadcast %cst_180 : f32 to vector<1x128xf32>
    %541 = vector.broadcast %cst_181 : f32 to vector<1x128xf32>
    %542 = arith.select %537, %540, %541 : vector<1x128xi1>, vector<1x128xf32>
    %543 = vector.broadcast %538 : f32 to vector<1x128xf32>
    %544 = arith.mulf %543, %527 : vector<1x128xf32>
    %545 = vector.broadcast %539 : f32 to vector<1x128xf32>
    %546 = arith.mulf %542, %545 : vector<1x128xf32>
    %547 = arith.mulf %546, %533 : vector<1x128xf32>
    %548 = arith.addf %544, %547 : vector<1x128xf32>
    %549 = vector.broadcast %538 : f32 to vector<1x128xf32>
    %550 = arith.mulf %549, %533 : vector<1x128xf32>
    %551 = vector.broadcast %539 : f32 to vector<1x128xf32>
    %552 = arith.mulf %542, %551 : vector<1x128xf32>
    %553 = arith.mulf %552, %527 : vector<1x128xf32>
    %554 = arith.subf %550, %553 : vector<1x128xf32>
    %c8_i32_182 = arith.constant 8 : i32
    %555 = vector.broadcast %c8_i32_182 : i32 to vector<1x128xi32>
    %556 = arith.andi %0, %555 : vector<1x128xi32>
    %c0_i32_183 = arith.constant 0 : i32
    %557 = vector.broadcast %c0_i32_183 : i32 to vector<1x128xi32>
    %558 = arith.cmpi eq, %556, %557 : vector<1x128xi32>
    %c24 = arith.constant 24 : index
    %559 = memref.load %arg0[%c24] : memref<60xf32, #tpu.memory_space<smem>>
    %c25 = arith.constant 25 : index
    %560 = memref.load %arg0[%c25] : memref<60xf32, #tpu.memory_space<smem>>
    %cst_184 = arith.constant 1.000000e+00 : f32
    %cst_185 = arith.constant -1.000000e+00 : f32
    %561 = vector.broadcast %cst_184 : f32 to vector<1x128xf32>
    %562 = vector.broadcast %cst_185 : f32 to vector<1x128xf32>
    %563 = arith.select %558, %561, %562 : vector<1x128xi1>, vector<1x128xf32>
    %564 = vector.broadcast %559 : f32 to vector<1x128xf32>
    %565 = arith.mulf %564, %548 : vector<1x128xf32>
    %566 = vector.broadcast %560 : f32 to vector<1x128xf32>
    %567 = arith.mulf %563, %566 : vector<1x128xf32>
    %568 = arith.mulf %567, %554 : vector<1x128xf32>
    %569 = arith.addf %565, %568 : vector<1x128xf32>
    %570 = vector.broadcast %559 : f32 to vector<1x128xf32>
    %571 = arith.mulf %570, %554 : vector<1x128xf32>
    %572 = vector.broadcast %560 : f32 to vector<1x128xf32>
    %573 = arith.mulf %563, %572 : vector<1x128xf32>
    %574 = arith.mulf %573, %548 : vector<1x128xf32>
    %575 = arith.subf %571, %574 : vector<1x128xf32>
    %c4_i32_186 = arith.constant 4 : i32
    %576 = vector.broadcast %c4_i32_186 : i32 to vector<1x128xi32>
    %577 = arith.andi %0, %576 : vector<1x128xi32>
    %c0_i32_187 = arith.constant 0 : i32
    %578 = vector.broadcast %c0_i32_187 : i32 to vector<1x128xi32>
    %579 = arith.cmpi eq, %577, %578 : vector<1x128xi32>
    %c26 = arith.constant 26 : index
    %580 = memref.load %arg0[%c26] : memref<60xf32, #tpu.memory_space<smem>>
    %c27 = arith.constant 27 : index
    %581 = memref.load %arg0[%c27] : memref<60xf32, #tpu.memory_space<smem>>
    %cst_188 = arith.constant 1.000000e+00 : f32
    %cst_189 = arith.constant -1.000000e+00 : f32
    %582 = vector.broadcast %cst_188 : f32 to vector<1x128xf32>
    %583 = vector.broadcast %cst_189 : f32 to vector<1x128xf32>
    %584 = arith.select %579, %582, %583 : vector<1x128xi1>, vector<1x128xf32>
    %585 = vector.broadcast %580 : f32 to vector<1x128xf32>
    %586 = arith.mulf %585, %569 : vector<1x128xf32>
    %587 = vector.broadcast %581 : f32 to vector<1x128xf32>
    %588 = arith.mulf %584, %587 : vector<1x128xf32>
    %589 = arith.mulf %588, %575 : vector<1x128xf32>
    %590 = arith.addf %586, %589 : vector<1x128xf32>
    %591 = vector.broadcast %580 : f32 to vector<1x128xf32>
    %592 = arith.mulf %591, %575 : vector<1x128xf32>
    %593 = vector.broadcast %581 : f32 to vector<1x128xf32>
    %594 = arith.mulf %584, %593 : vector<1x128xf32>
    %595 = arith.mulf %594, %569 : vector<1x128xf32>
    %596 = arith.subf %592, %595 : vector<1x128xf32>
    %c2_i32_190 = arith.constant 2 : i32
    %597 = vector.broadcast %c2_i32_190 : i32 to vector<1x128xi32>
    %598 = arith.andi %0, %597 : vector<1x128xi32>
    %c0_i32_191 = arith.constant 0 : i32
    %599 = vector.broadcast %c0_i32_191 : i32 to vector<1x128xi32>
    %600 = arith.cmpi eq, %598, %599 : vector<1x128xi32>
    %c28 = arith.constant 28 : index
    %601 = memref.load %arg0[%c28] : memref<60xf32, #tpu.memory_space<smem>>
    %c29 = arith.constant 29 : index
    %602 = memref.load %arg0[%c29] : memref<60xf32, #tpu.memory_space<smem>>
    %cst_192 = arith.constant 1.000000e+00 : f32
    %cst_193 = arith.constant -1.000000e+00 : f32
    %603 = vector.broadcast %cst_192 : f32 to vector<1x128xf32>
    %604 = vector.broadcast %cst_193 : f32 to vector<1x128xf32>
    %605 = arith.select %600, %603, %604 : vector<1x128xi1>, vector<1x128xf32>
    %606 = vector.broadcast %601 : f32 to vector<1x128xf32>
    %607 = arith.mulf %606, %590 : vector<1x128xf32>
    %608 = vector.broadcast %602 : f32 to vector<1x128xf32>
    %609 = arith.mulf %605, %608 : vector<1x128xf32>
    %610 = arith.mulf %609, %596 : vector<1x128xf32>
    %611 = arith.addf %607, %610 : vector<1x128xf32>
    %612 = vector.broadcast %601 : f32 to vector<1x128xf32>
    %613 = arith.mulf %612, %596 : vector<1x128xf32>
    %614 = vector.broadcast %602 : f32 to vector<1x128xf32>
    %615 = arith.mulf %605, %614 : vector<1x128xf32>
    %616 = arith.mulf %615, %590 : vector<1x128xf32>
    %617 = arith.subf %613, %616 : vector<1x128xf32>
    %c1_i32_194 = arith.constant 1 : i32
    %618 = vector.broadcast %c1_i32_194 : i32 to vector<1x128xi32>
    %619 = arith.andi %0, %618 : vector<1x128xi32>
    %c0_i32_195 = arith.constant 0 : i32
    %620 = vector.broadcast %c0_i32_195 : i32 to vector<1x128xi32>
    %621 = arith.cmpi eq, %619, %620 : vector<1x128xi32>
    %c30 = arith.constant 30 : index
    %622 = memref.load %arg0[%c30] : memref<60xf32, #tpu.memory_space<smem>>
    %c31 = arith.constant 31 : index
    %623 = memref.load %arg0[%c31] : memref<60xf32, #tpu.memory_space<smem>>
    %cst_196 = arith.constant 1.000000e+00 : f32
    %cst_197 = arith.constant -1.000000e+00 : f32
    %624 = vector.broadcast %cst_196 : f32 to vector<1x128xf32>
    %625 = vector.broadcast %cst_197 : f32 to vector<1x128xf32>
    %626 = arith.select %621, %624, %625 : vector<1x128xi1>, vector<1x128xf32>
    %627 = vector.broadcast %622 : f32 to vector<1x128xf32>
    %628 = arith.mulf %627, %611 : vector<1x128xf32>
    %629 = vector.broadcast %623 : f32 to vector<1x128xf32>
    %630 = arith.mulf %626, %629 : vector<1x128xf32>
    %631 = arith.mulf %630, %617 : vector<1x128xf32>
    %632 = arith.addf %628, %631 : vector<1x128xf32>
    %633 = vector.broadcast %622 : f32 to vector<1x128xf32>
    %634 = arith.mulf %633, %617 : vector<1x128xf32>
    %635 = vector.broadcast %623 : f32 to vector<1x128xf32>
    %636 = arith.mulf %626, %635 : vector<1x128xf32>
    %637 = arith.mulf %636, %611 : vector<1x128xf32>
    %638 = arith.subf %634, %637 : vector<1x128xf32>
    %c32_i32_198 = arith.constant 32 : i32
    %639 = vector.broadcast %c32_i32_198 : i32 to vector<1x128xi32>
    %640 = arith.andi %0, %639 : vector<1x128xi32>
    %c0_i32_199 = arith.constant 0 : i32
    %641 = vector.broadcast %c0_i32_199 : i32 to vector<1x128xi32>
    %642 = arith.cmpi eq, %640, %641 : vector<1x128xi32>
    %c64_i32_200 = arith.constant 64 : i32
    %643 = vector.broadcast %c64_i32_200 : i32 to vector<1x128xi32>
    %644 = arith.andi %0, %643 : vector<1x128xi32>
    %c0_i32_201 = arith.constant 0 : i32
    %645 = vector.broadcast %c0_i32_201 : i32 to vector<1x128xi32>
    %646 = arith.cmpi ne, %644, %645 : vector<1x128xi32>
    %c96_i32_202 = arith.constant 96 : i32
    %647 = tpu.dynamic_rotate %632 by %c96_i32_202 dim 1 : vector<1x128xf32>, i32 -> vector<1x128xf32>
    %c32_i32_203 = arith.constant 32 : i32
    %648 = tpu.dynamic_rotate %632 by %c32_i32_203 dim 1 : vector<1x128xf32>, i32 -> vector<1x128xf32>
    %649 = arith.select %642, %647, %648 : vector<1x128xi1>, vector<1x128xf32>
    %c96_i32_204 = arith.constant 96 : i32
    %650 = tpu.dynamic_rotate %638 by %c96_i32_204 dim 1 : vector<1x128xf32>, i32 -> vector<1x128xf32>
    %c32_i32_205 = arith.constant 32 : i32
    %651 = tpu.dynamic_rotate %638 by %c32_i32_205 dim 1 : vector<1x128xf32>, i32 -> vector<1x128xf32>
    %652 = arith.select %642, %650, %651 : vector<1x128xi1>, vector<1x128xf32>
    %653 = arith.select %646, %649, %632 : vector<1x128xi1>, vector<1x128xf32>
    %654 = arith.select %646, %652, %638 : vector<1x128xi1>, vector<1x128xf32>
    %c16_i32_206 = arith.constant 16 : i32
    %655 = vector.broadcast %c16_i32_206 : i32 to vector<1x128xi32>
    %656 = arith.andi %0, %655 : vector<1x128xi32>
    %c0_i32_207 = arith.constant 0 : i32
    %657 = vector.broadcast %c0_i32_207 : i32 to vector<1x128xi32>
    %658 = arith.cmpi eq, %656, %657 : vector<1x128xi32>
    %c32_i32_208 = arith.constant 32 : i32
    %659 = vector.broadcast %c32_i32_208 : i32 to vector<1x128xi32>
    %660 = arith.andi %0, %659 : vector<1x128xi32>
    %c0_i32_209 = arith.constant 0 : i32
    %661 = vector.broadcast %c0_i32_209 : i32 to vector<1x128xi32>
    %662 = arith.cmpi ne, %660, %661 : vector<1x128xi32>
    %c112_i32_210 = arith.constant 112 : i32
    %663 = tpu.dynamic_rotate %653 by %c112_i32_210 dim 1 : vector<1x128xf32>, i32 -> vector<1x128xf32>
    %c16_i32_211 = arith.constant 16 : i32
    %664 = tpu.dynamic_rotate %653 by %c16_i32_211 dim 1 : vector<1x128xf32>, i32 -> vector<1x128xf32>
    %665 = arith.select %658, %663, %664 : vector<1x128xi1>, vector<1x128xf32>
    %c112_i32_212 = arith.constant 112 : i32
    %666 = tpu.dynamic_rotate %654 by %c112_i32_212 dim 1 : vector<1x128xf32>, i32 -> vector<1x128xf32>
    %c16_i32_213 = arith.constant 16 : i32
    %667 = tpu.dynamic_rotate %654 by %c16_i32_213 dim 1 : vector<1x128xf32>, i32 -> vector<1x128xf32>
    %668 = arith.select %658, %666, %667 : vector<1x128xi1>, vector<1x128xf32>
    %669 = arith.select %662, %665, %653 : vector<1x128xi1>, vector<1x128xf32>
    %670 = arith.select %662, %668, %654 : vector<1x128xi1>, vector<1x128xf32>
    %c8_i32_214 = arith.constant 8 : i32
    %671 = vector.broadcast %c8_i32_214 : i32 to vector<1x128xi32>
    %672 = arith.andi %0, %671 : vector<1x128xi32>
    %c0_i32_215 = arith.constant 0 : i32
    %673 = vector.broadcast %c0_i32_215 : i32 to vector<1x128xi32>
    %674 = arith.cmpi eq, %672, %673 : vector<1x128xi32>
    %c16_i32_216 = arith.constant 16 : i32
    %675 = vector.broadcast %c16_i32_216 : i32 to vector<1x128xi32>
    %676 = arith.andi %0, %675 : vector<1x128xi32>
    %c0_i32_217 = arith.constant 0 : i32
    %677 = vector.broadcast %c0_i32_217 : i32 to vector<1x128xi32>
    %678 = arith.cmpi ne, %676, %677 : vector<1x128xi32>
    %c120_i32_218 = arith.constant 120 : i32
    %679 = tpu.dynamic_rotate %669 by %c120_i32_218 dim 1 : vector<1x128xf32>, i32 -> vector<1x128xf32>
    %c8_i32_219 = arith.constant 8 : i32
    %680 = tpu.dynamic_rotate %669 by %c8_i32_219 dim 1 : vector<1x128xf32>, i32 -> vector<1x128xf32>
    %681 = arith.select %674, %679, %680 : vector<1x128xi1>, vector<1x128xf32>
    %c120_i32_220 = arith.constant 120 : i32
    %682 = tpu.dynamic_rotate %670 by %c120_i32_220 dim 1 : vector<1x128xf32>, i32 -> vector<1x128xf32>
    %c8_i32_221 = arith.constant 8 : i32
    %683 = tpu.dynamic_rotate %670 by %c8_i32_221 dim 1 : vector<1x128xf32>, i32 -> vector<1x128xf32>
    %684 = arith.select %674, %682, %683 : vector<1x128xi1>, vector<1x128xf32>
    %685 = arith.select %678, %681, %669 : vector<1x128xi1>, vector<1x128xf32>
    %686 = arith.select %678, %684, %670 : vector<1x128xi1>, vector<1x128xf32>
    %c4_i32_222 = arith.constant 4 : i32
    %687 = vector.broadcast %c4_i32_222 : i32 to vector<1x128xi32>
    %688 = arith.andi %0, %687 : vector<1x128xi32>
    %c0_i32_223 = arith.constant 0 : i32
    %689 = vector.broadcast %c0_i32_223 : i32 to vector<1x128xi32>
    %690 = arith.cmpi eq, %688, %689 : vector<1x128xi32>
    %c8_i32_224 = arith.constant 8 : i32
    %691 = vector.broadcast %c8_i32_224 : i32 to vector<1x128xi32>
    %692 = arith.andi %0, %691 : vector<1x128xi32>
    %c0_i32_225 = arith.constant 0 : i32
    %693 = vector.broadcast %c0_i32_225 : i32 to vector<1x128xi32>
    %694 = arith.cmpi ne, %692, %693 : vector<1x128xi32>
    %c124_i32_226 = arith.constant 124 : i32
    %695 = tpu.dynamic_rotate %685 by %c124_i32_226 dim 1 : vector<1x128xf32>, i32 -> vector<1x128xf32>
    %c4_i32_227 = arith.constant 4 : i32
    %696 = tpu.dynamic_rotate %685 by %c4_i32_227 dim 1 : vector<1x128xf32>, i32 -> vector<1x128xf32>
    %697 = arith.select %690, %695, %696 : vector<1x128xi1>, vector<1x128xf32>
    %c124_i32_228 = arith.constant 124 : i32
    %698 = tpu.dynamic_rotate %686 by %c124_i32_228 dim 1 : vector<1x128xf32>, i32 -> vector<1x128xf32>
    %c4_i32_229 = arith.constant 4 : i32
    %699 = tpu.dynamic_rotate %686 by %c4_i32_229 dim 1 : vector<1x128xf32>, i32 -> vector<1x128xf32>
    %700 = arith.select %690, %698, %699 : vector<1x128xi1>, vector<1x128xf32>
    %701 = arith.select %694, %697, %685 : vector<1x128xi1>, vector<1x128xf32>
    %702 = arith.select %694, %700, %686 : vector<1x128xi1>, vector<1x128xf32>
    %c2_i32_230 = arith.constant 2 : i32
    %703 = vector.broadcast %c2_i32_230 : i32 to vector<1x128xi32>
    %704 = arith.andi %0, %703 : vector<1x128xi32>
    %c0_i32_231 = arith.constant 0 : i32
    %705 = vector.broadcast %c0_i32_231 : i32 to vector<1x128xi32>
    %706 = arith.cmpi eq, %704, %705 : vector<1x128xi32>
    %c4_i32_232 = arith.constant 4 : i32
    %707 = vector.broadcast %c4_i32_232 : i32 to vector<1x128xi32>
    %708 = arith.andi %0, %707 : vector<1x128xi32>
    %c0_i32_233 = arith.constant 0 : i32
    %709 = vector.broadcast %c0_i32_233 : i32 to vector<1x128xi32>
    %710 = arith.cmpi ne, %708, %709 : vector<1x128xi32>
    %c126_i32_234 = arith.constant 126 : i32
    %711 = tpu.dynamic_rotate %701 by %c126_i32_234 dim 1 : vector<1x128xf32>, i32 -> vector<1x128xf32>
    %c2_i32_235 = arith.constant 2 : i32
    %712 = tpu.dynamic_rotate %701 by %c2_i32_235 dim 1 : vector<1x128xf32>, i32 -> vector<1x128xf32>
    %713 = arith.select %706, %711, %712 : vector<1x128xi1>, vector<1x128xf32>
    %c126_i32_236 = arith.constant 126 : i32
    %714 = tpu.dynamic_rotate %702 by %c126_i32_236 dim 1 : vector<1x128xf32>, i32 -> vector<1x128xf32>
    %c2_i32_237 = arith.constant 2 : i32
    %715 = tpu.dynamic_rotate %702 by %c2_i32_237 dim 1 : vector<1x128xf32>, i32 -> vector<1x128xf32>
    %716 = arith.select %706, %714, %715 : vector<1x128xi1>, vector<1x128xf32>
    %717 = arith.select %710, %713, %701 : vector<1x128xi1>, vector<1x128xf32>
    %718 = arith.select %710, %716, %702 : vector<1x128xi1>, vector<1x128xf32>
    %c1_i32_238 = arith.constant 1 : i32
    %719 = vector.broadcast %c1_i32_238 : i32 to vector<1x128xi32>
    %720 = arith.andi %0, %719 : vector<1x128xi32>
    %c0_i32_239 = arith.constant 0 : i32
    %721 = vector.broadcast %c0_i32_239 : i32 to vector<1x128xi32>
    %722 = arith.cmpi eq, %720, %721 : vector<1x128xi32>
    %c2_i32_240 = arith.constant 2 : i32
    %723 = vector.broadcast %c2_i32_240 : i32 to vector<1x128xi32>
    %724 = arith.andi %0, %723 : vector<1x128xi32>
    %c0_i32_241 = arith.constant 0 : i32
    %725 = vector.broadcast %c0_i32_241 : i32 to vector<1x128xi32>
    %726 = arith.cmpi ne, %724, %725 : vector<1x128xi32>
    %c127_i32_242 = arith.constant 127 : i32
    %727 = tpu.dynamic_rotate %717 by %c127_i32_242 dim 1 : vector<1x128xf32>, i32 -> vector<1x128xf32>
    %c1_i32_243 = arith.constant 1 : i32
    %728 = tpu.dynamic_rotate %717 by %c1_i32_243 dim 1 : vector<1x128xf32>, i32 -> vector<1x128xf32>
    %729 = arith.select %722, %727, %728 : vector<1x128xi1>, vector<1x128xf32>
    %c127_i32_244 = arith.constant 127 : i32
    %730 = tpu.dynamic_rotate %718 by %c127_i32_244 dim 1 : vector<1x128xf32>, i32 -> vector<1x128xf32>
    %c1_i32_245 = arith.constant 1 : i32
    %731 = tpu.dynamic_rotate %718 by %c1_i32_245 dim 1 : vector<1x128xf32>, i32 -> vector<1x128xf32>
    %732 = arith.select %722, %730, %731 : vector<1x128xi1>, vector<1x128xf32>
    %733 = arith.select %726, %729, %717 : vector<1x128xi1>, vector<1x128xf32>
    %734 = arith.select %726, %732, %718 : vector<1x128xi1>, vector<1x128xf32>
    %c64_i32_246 = arith.constant 64 : i32
    %735 = vector.broadcast %c64_i32_246 : i32 to vector<1x128xi32>
    %736 = arith.andi %0, %735 : vector<1x128xi32>
    %c0_i32_247 = arith.constant 0 : i32
    %737 = vector.broadcast %c0_i32_247 : i32 to vector<1x128xi32>
    %738 = arith.cmpi eq, %736, %737 : vector<1x128xi32>
    %c1_i32_248 = arith.constant 1 : i32
    %739 = vector.broadcast %c1_i32_248 : i32 to vector<1x128xi32>
    %740 = arith.andi %0, %739 : vector<1x128xi32>
    %c0_i32_249 = arith.constant 0 : i32
    %741 = vector.broadcast %c0_i32_249 : i32 to vector<1x128xi32>
    %742 = arith.cmpi ne, %740, %741 : vector<1x128xi32>
    %c64_i32_250 = arith.constant 64 : i32
    %743 = tpu.dynamic_rotate %733 by %c64_i32_250 dim 1 : vector<1x128xf32>, i32 -> vector<1x128xf32>
    %c64_i32_251 = arith.constant 64 : i32
    %744 = tpu.dynamic_rotate %733 by %c64_i32_251 dim 1 : vector<1x128xf32>, i32 -> vector<1x128xf32>
    %745 = arith.select %738, %743, %744 : vector<1x128xi1>, vector<1x128xf32>
    %c64_i32_252 = arith.constant 64 : i32
    %746 = tpu.dynamic_rotate %734 by %c64_i32_252 dim 1 : vector<1x128xf32>, i32 -> vector<1x128xf32>
    %c64_i32_253 = arith.constant 64 : i32
    %747 = tpu.dynamic_rotate %734 by %c64_i32_253 dim 1 : vector<1x128xf32>, i32 -> vector<1x128xf32>
    %748 = arith.select %738, %746, %747 : vector<1x128xi1>, vector<1x128xf32>
    %749 = arith.select %742, %745, %733 : vector<1x128xi1>, vector<1x128xf32>
    %750 = arith.select %742, %748, %734 : vector<1x128xi1>, vector<1x128xf32>
    %c64_i32_254 = arith.constant 64 : i32
    %751 = vector.broadcast %c64_i32_254 : i32 to vector<1x128xi32>
    %752 = arith.andi %0, %751 : vector<1x128xi32>
    %c0_i32_255 = arith.constant 0 : i32
    %753 = vector.broadcast %c0_i32_255 : i32 to vector<1x128xi32>
    %754 = arith.cmpi eq, %752, %753 : vector<1x128xi32>
    %c32 = arith.constant 32 : index
    %755 = memref.load %arg0[%c32] : memref<60xf32, #tpu.memory_space<smem>>
    %c33 = arith.constant 33 : index
    %756 = memref.load %arg0[%c33] : memref<60xf32, #tpu.memory_space<smem>>
    %c64_i32_256 = arith.constant 64 : i32
    %757 = tpu.dynamic_rotate %749 by %c64_i32_256 dim 1 : vector<1x128xf32>, i32 -> vector<1x128xf32>
    %c64_i32_257 = arith.constant 64 : i32
    %758 = tpu.dynamic_rotate %749 by %c64_i32_257 dim 1 : vector<1x128xf32>, i32 -> vector<1x128xf32>
    %759 = arith.select %754, %757, %758 : vector<1x128xi1>, vector<1x128xf32>
    %c64_i32_258 = arith.constant 64 : i32
    %760 = tpu.dynamic_rotate %750 by %c64_i32_258 dim 1 : vector<1x128xf32>, i32 -> vector<1x128xf32>
    %c64_i32_259 = arith.constant 64 : i32
    %761 = tpu.dynamic_rotate %750 by %c64_i32_259 dim 1 : vector<1x128xf32>, i32 -> vector<1x128xf32>
    %762 = arith.select %754, %760, %761 : vector<1x128xi1>, vector<1x128xf32>
    %763 = vector.broadcast %755 : f32 to vector<1x128xf32>
    %764 = arith.mulf %763, %749 : vector<1x128xf32>
    %765 = vector.broadcast %756 : f32 to vector<1x128xf32>
    %766 = arith.mulf %765, %762 : vector<1x128xf32>
    %767 = arith.addf %764, %766 : vector<1x128xf32>
    %768 = vector.broadcast %755 : f32 to vector<1x128xf32>
    %769 = arith.mulf %768, %750 : vector<1x128xf32>
    %770 = vector.broadcast %756 : f32 to vector<1x128xf32>
    %771 = arith.mulf %770, %759 : vector<1x128xf32>
    %772 = arith.subf %769, %771 : vector<1x128xf32>
    %c32_i32_260 = arith.constant 32 : i32
    %773 = vector.broadcast %c32_i32_260 : i32 to vector<1x128xi32>
    %774 = arith.andi %0, %773 : vector<1x128xi32>
    %c0_i32_261 = arith.constant 0 : i32
    %775 = vector.broadcast %c0_i32_261 : i32 to vector<1x128xi32>
    %776 = arith.cmpi eq, %774, %775 : vector<1x128xi32>
    %c34 = arith.constant 34 : index
    %777 = memref.load %arg0[%c34] : memref<60xf32, #tpu.memory_space<smem>>
    %c35 = arith.constant 35 : index
    %778 = memref.load %arg0[%c35] : memref<60xf32, #tpu.memory_space<smem>>
    %c96_i32_262 = arith.constant 96 : i32
    %779 = tpu.dynamic_rotate %767 by %c96_i32_262 dim 1 : vector<1x128xf32>, i32 -> vector<1x128xf32>
    %c32_i32_263 = arith.constant 32 : i32
    %780 = tpu.dynamic_rotate %767 by %c32_i32_263 dim 1 : vector<1x128xf32>, i32 -> vector<1x128xf32>
    %781 = arith.select %776, %779, %780 : vector<1x128xi1>, vector<1x128xf32>
    %c96_i32_264 = arith.constant 96 : i32
    %782 = tpu.dynamic_rotate %772 by %c96_i32_264 dim 1 : vector<1x128xf32>, i32 -> vector<1x128xf32>
    %c32_i32_265 = arith.constant 32 : i32
    %783 = tpu.dynamic_rotate %772 by %c32_i32_265 dim 1 : vector<1x128xf32>, i32 -> vector<1x128xf32>
    %784 = arith.select %776, %782, %783 : vector<1x128xi1>, vector<1x128xf32>
    %785 = vector.broadcast %777 : f32 to vector<1x128xf32>
    %786 = arith.mulf %785, %767 : vector<1x128xf32>
    %787 = vector.broadcast %778 : f32 to vector<1x128xf32>
    %788 = arith.mulf %787, %784 : vector<1x128xf32>
    %789 = arith.addf %786, %788 : vector<1x128xf32>
    %790 = vector.broadcast %777 : f32 to vector<1x128xf32>
    %791 = arith.mulf %790, %772 : vector<1x128xf32>
    %792 = vector.broadcast %778 : f32 to vector<1x128xf32>
    %793 = arith.mulf %792, %781 : vector<1x128xf32>
    %794 = arith.subf %791, %793 : vector<1x128xf32>
    %c16_i32_266 = arith.constant 16 : i32
    %795 = vector.broadcast %c16_i32_266 : i32 to vector<1x128xi32>
    %796 = arith.andi %0, %795 : vector<1x128xi32>
    %c0_i32_267 = arith.constant 0 : i32
    %797 = vector.broadcast %c0_i32_267 : i32 to vector<1x128xi32>
    %798 = arith.cmpi eq, %796, %797 : vector<1x128xi32>
    %c36 = arith.constant 36 : index
    %799 = memref.load %arg0[%c36] : memref<60xf32, #tpu.memory_space<smem>>
    %c37 = arith.constant 37 : index
    %800 = memref.load %arg0[%c37] : memref<60xf32, #tpu.memory_space<smem>>
    %c112_i32_268 = arith.constant 112 : i32
    %801 = tpu.dynamic_rotate %789 by %c112_i32_268 dim 1 : vector<1x128xf32>, i32 -> vector<1x128xf32>
    %c16_i32_269 = arith.constant 16 : i32
    %802 = tpu.dynamic_rotate %789 by %c16_i32_269 dim 1 : vector<1x128xf32>, i32 -> vector<1x128xf32>
    %803 = arith.select %798, %801, %802 : vector<1x128xi1>, vector<1x128xf32>
    %c112_i32_270 = arith.constant 112 : i32
    %804 = tpu.dynamic_rotate %794 by %c112_i32_270 dim 1 : vector<1x128xf32>, i32 -> vector<1x128xf32>
    %c16_i32_271 = arith.constant 16 : i32
    %805 = tpu.dynamic_rotate %794 by %c16_i32_271 dim 1 : vector<1x128xf32>, i32 -> vector<1x128xf32>
    %806 = arith.select %798, %804, %805 : vector<1x128xi1>, vector<1x128xf32>
    %807 = vector.broadcast %799 : f32 to vector<1x128xf32>
    %808 = arith.mulf %807, %789 : vector<1x128xf32>
    %809 = vector.broadcast %800 : f32 to vector<1x128xf32>
    %810 = arith.mulf %809, %806 : vector<1x128xf32>
    %811 = arith.addf %808, %810 : vector<1x128xf32>
    %812 = vector.broadcast %799 : f32 to vector<1x128xf32>
    %813 = arith.mulf %812, %794 : vector<1x128xf32>
    %814 = vector.broadcast %800 : f32 to vector<1x128xf32>
    %815 = arith.mulf %814, %803 : vector<1x128xf32>
    %816 = arith.subf %813, %815 : vector<1x128xf32>
    %c8_i32_272 = arith.constant 8 : i32
    %817 = vector.broadcast %c8_i32_272 : i32 to vector<1x128xi32>
    %818 = arith.andi %0, %817 : vector<1x128xi32>
    %c0_i32_273 = arith.constant 0 : i32
    %819 = vector.broadcast %c0_i32_273 : i32 to vector<1x128xi32>
    %820 = arith.cmpi eq, %818, %819 : vector<1x128xi32>
    %c38 = arith.constant 38 : index
    %821 = memref.load %arg0[%c38] : memref<60xf32, #tpu.memory_space<smem>>
    %c39 = arith.constant 39 : index
    %822 = memref.load %arg0[%c39] : memref<60xf32, #tpu.memory_space<smem>>
    %c120_i32_274 = arith.constant 120 : i32
    %823 = tpu.dynamic_rotate %811 by %c120_i32_274 dim 1 : vector<1x128xf32>, i32 -> vector<1x128xf32>
    %c8_i32_275 = arith.constant 8 : i32
    %824 = tpu.dynamic_rotate %811 by %c8_i32_275 dim 1 : vector<1x128xf32>, i32 -> vector<1x128xf32>
    %825 = arith.select %820, %823, %824 : vector<1x128xi1>, vector<1x128xf32>
    %c120_i32_276 = arith.constant 120 : i32
    %826 = tpu.dynamic_rotate %816 by %c120_i32_276 dim 1 : vector<1x128xf32>, i32 -> vector<1x128xf32>
    %c8_i32_277 = arith.constant 8 : i32
    %827 = tpu.dynamic_rotate %816 by %c8_i32_277 dim 1 : vector<1x128xf32>, i32 -> vector<1x128xf32>
    %828 = arith.select %820, %826, %827 : vector<1x128xi1>, vector<1x128xf32>
    %829 = vector.broadcast %821 : f32 to vector<1x128xf32>
    %830 = arith.mulf %829, %811 : vector<1x128xf32>
    %831 = vector.broadcast %822 : f32 to vector<1x128xf32>
    %832 = arith.mulf %831, %828 : vector<1x128xf32>
    %833 = arith.addf %830, %832 : vector<1x128xf32>
    %834 = vector.broadcast %821 : f32 to vector<1x128xf32>
    %835 = arith.mulf %834, %816 : vector<1x128xf32>
    %836 = vector.broadcast %822 : f32 to vector<1x128xf32>
    %837 = arith.mulf %836, %825 : vector<1x128xf32>
    %838 = arith.subf %835, %837 : vector<1x128xf32>
    %c4_i32_278 = arith.constant 4 : i32
    %839 = vector.broadcast %c4_i32_278 : i32 to vector<1x128xi32>
    %840 = arith.andi %0, %839 : vector<1x128xi32>
    %c0_i32_279 = arith.constant 0 : i32
    %841 = vector.broadcast %c0_i32_279 : i32 to vector<1x128xi32>
    %842 = arith.cmpi eq, %840, %841 : vector<1x128xi32>
    %c40 = arith.constant 40 : index
    %843 = memref.load %arg0[%c40] : memref<60xf32, #tpu.memory_space<smem>>
    %c41 = arith.constant 41 : index
    %844 = memref.load %arg0[%c41] : memref<60xf32, #tpu.memory_space<smem>>
    %c124_i32_280 = arith.constant 124 : i32
    %845 = tpu.dynamic_rotate %833 by %c124_i32_280 dim 1 : vector<1x128xf32>, i32 -> vector<1x128xf32>
    %c4_i32_281 = arith.constant 4 : i32
    %846 = tpu.dynamic_rotate %833 by %c4_i32_281 dim 1 : vector<1x128xf32>, i32 -> vector<1x128xf32>
    %847 = arith.select %842, %845, %846 : vector<1x128xi1>, vector<1x128xf32>
    %c124_i32_282 = arith.constant 124 : i32
    %848 = tpu.dynamic_rotate %838 by %c124_i32_282 dim 1 : vector<1x128xf32>, i32 -> vector<1x128xf32>
    %c4_i32_283 = arith.constant 4 : i32
    %849 = tpu.dynamic_rotate %838 by %c4_i32_283 dim 1 : vector<1x128xf32>, i32 -> vector<1x128xf32>
    %850 = arith.select %842, %848, %849 : vector<1x128xi1>, vector<1x128xf32>
    %851 = vector.broadcast %843 : f32 to vector<1x128xf32>
    %852 = arith.mulf %851, %833 : vector<1x128xf32>
    %853 = vector.broadcast %844 : f32 to vector<1x128xf32>
    %854 = arith.mulf %853, %850 : vector<1x128xf32>
    %855 = arith.addf %852, %854 : vector<1x128xf32>
    %856 = vector.broadcast %843 : f32 to vector<1x128xf32>
    %857 = arith.mulf %856, %838 : vector<1x128xf32>
    %858 = vector.broadcast %844 : f32 to vector<1x128xf32>
    %859 = arith.mulf %858, %847 : vector<1x128xf32>
    %860 = arith.subf %857, %859 : vector<1x128xf32>
    %c2_i32_284 = arith.constant 2 : i32
    %861 = vector.broadcast %c2_i32_284 : i32 to vector<1x128xi32>
    %862 = arith.andi %0, %861 : vector<1x128xi32>
    %c0_i32_285 = arith.constant 0 : i32
    %863 = vector.broadcast %c0_i32_285 : i32 to vector<1x128xi32>
    %864 = arith.cmpi eq, %862, %863 : vector<1x128xi32>
    %c42 = arith.constant 42 : index
    %865 = memref.load %arg0[%c42] : memref<60xf32, #tpu.memory_space<smem>>
    %c43 = arith.constant 43 : index
    %866 = memref.load %arg0[%c43] : memref<60xf32, #tpu.memory_space<smem>>
    %c126_i32_286 = arith.constant 126 : i32
    %867 = tpu.dynamic_rotate %855 by %c126_i32_286 dim 1 : vector<1x128xf32>, i32 -> vector<1x128xf32>
    %c2_i32_287 = arith.constant 2 : i32
    %868 = tpu.dynamic_rotate %855 by %c2_i32_287 dim 1 : vector<1x128xf32>, i32 -> vector<1x128xf32>
    %869 = arith.select %864, %867, %868 : vector<1x128xi1>, vector<1x128xf32>
    %c126_i32_288 = arith.constant 126 : i32
    %870 = tpu.dynamic_rotate %860 by %c126_i32_288 dim 1 : vector<1x128xf32>, i32 -> vector<1x128xf32>
    %c2_i32_289 = arith.constant 2 : i32
    %871 = tpu.dynamic_rotate %860 by %c2_i32_289 dim 1 : vector<1x128xf32>, i32 -> vector<1x128xf32>
    %872 = arith.select %864, %870, %871 : vector<1x128xi1>, vector<1x128xf32>
    %873 = vector.broadcast %865 : f32 to vector<1x128xf32>
    %874 = arith.mulf %873, %855 : vector<1x128xf32>
    %875 = vector.broadcast %866 : f32 to vector<1x128xf32>
    %876 = arith.mulf %875, %872 : vector<1x128xf32>
    %877 = arith.addf %874, %876 : vector<1x128xf32>
    %878 = vector.broadcast %865 : f32 to vector<1x128xf32>
    %879 = arith.mulf %878, %860 : vector<1x128xf32>
    %880 = vector.broadcast %866 : f32 to vector<1x128xf32>
    %881 = arith.mulf %880, %869 : vector<1x128xf32>
    %882 = arith.subf %879, %881 : vector<1x128xf32>
    %c1_i32_290 = arith.constant 1 : i32
    %883 = vector.broadcast %c1_i32_290 : i32 to vector<1x128xi32>
    %884 = arith.andi %0, %883 : vector<1x128xi32>
    %c0_i32_291 = arith.constant 0 : i32
    %885 = vector.broadcast %c0_i32_291 : i32 to vector<1x128xi32>
    %886 = arith.cmpi eq, %884, %885 : vector<1x128xi32>
    %c44 = arith.constant 44 : index
    %887 = memref.load %arg0[%c44] : memref<60xf32, #tpu.memory_space<smem>>
    %c45 = arith.constant 45 : index
    %888 = memref.load %arg0[%c45] : memref<60xf32, #tpu.memory_space<smem>>
    %c127_i32_292 = arith.constant 127 : i32
    %889 = tpu.dynamic_rotate %877 by %c127_i32_292 dim 1 : vector<1x128xf32>, i32 -> vector<1x128xf32>
    %c1_i32_293 = arith.constant 1 : i32
    %890 = tpu.dynamic_rotate %877 by %c1_i32_293 dim 1 : vector<1x128xf32>, i32 -> vector<1x128xf32>
    %891 = arith.select %886, %889, %890 : vector<1x128xi1>, vector<1x128xf32>
    %c127_i32_294 = arith.constant 127 : i32
    %892 = tpu.dynamic_rotate %882 by %c127_i32_294 dim 1 : vector<1x128xf32>, i32 -> vector<1x128xf32>
    %c1_i32_295 = arith.constant 1 : i32
    %893 = tpu.dynamic_rotate %882 by %c1_i32_295 dim 1 : vector<1x128xf32>, i32 -> vector<1x128xf32>
    %894 = arith.select %886, %892, %893 : vector<1x128xi1>, vector<1x128xf32>
    %895 = vector.broadcast %887 : f32 to vector<1x128xf32>
    %896 = arith.mulf %895, %877 : vector<1x128xf32>
    %897 = vector.broadcast %888 : f32 to vector<1x128xf32>
    %898 = arith.mulf %897, %894 : vector<1x128xf32>
    %899 = arith.addf %896, %898 : vector<1x128xf32>
    %900 = vector.broadcast %887 : f32 to vector<1x128xf32>
    %901 = arith.mulf %900, %882 : vector<1x128xf32>
    %902 = vector.broadcast %888 : f32 to vector<1x128xf32>
    %903 = arith.mulf %902, %891 : vector<1x128xf32>
    %904 = arith.subf %901, %903 : vector<1x128xf32>
    %c64_i32_296 = arith.constant 64 : i32
    %905 = vector.broadcast %c64_i32_296 : i32 to vector<1x128xi32>
    %906 = arith.andi %0, %905 : vector<1x128xi32>
    %c0_i32_297 = arith.constant 0 : i32
    %907 = vector.broadcast %c0_i32_297 : i32 to vector<1x128xi32>
    %908 = arith.cmpi eq, %906, %907 : vector<1x128xi32>
    %c46 = arith.constant 46 : index
    %909 = memref.load %arg0[%c46] : memref<60xf32, #tpu.memory_space<smem>>
    %c47 = arith.constant 47 : index
    %910 = memref.load %arg0[%c47] : memref<60xf32, #tpu.memory_space<smem>>
    %cst_298 = arith.constant 1.000000e+00 : f32
    %cst_299 = arith.constant -1.000000e+00 : f32
    %911 = vector.broadcast %cst_298 : f32 to vector<1x128xf32>
    %912 = vector.broadcast %cst_299 : f32 to vector<1x128xf32>
    %913 = arith.select %908, %911, %912 : vector<1x128xi1>, vector<1x128xf32>
    %914 = vector.broadcast %909 : f32 to vector<1x128xf32>
    %915 = arith.mulf %914, %899 : vector<1x128xf32>
    %916 = vector.broadcast %910 : f32 to vector<1x128xf32>
    %917 = arith.mulf %913, %916 : vector<1x128xf32>
    %918 = arith.mulf %917, %904 : vector<1x128xf32>
    %919 = arith.addf %915, %918 : vector<1x128xf32>
    %920 = vector.broadcast %909 : f32 to vector<1x128xf32>
    %921 = arith.mulf %920, %904 : vector<1x128xf32>
    %922 = vector.broadcast %910 : f32 to vector<1x128xf32>
    %923 = arith.mulf %913, %922 : vector<1x128xf32>
    %924 = arith.mulf %923, %899 : vector<1x128xf32>
    %925 = arith.subf %921, %924 : vector<1x128xf32>
    %c32_i32_300 = arith.constant 32 : i32
    %926 = vector.broadcast %c32_i32_300 : i32 to vector<1x128xi32>
    %927 = arith.andi %0, %926 : vector<1x128xi32>
    %c0_i32_301 = arith.constant 0 : i32
    %928 = vector.broadcast %c0_i32_301 : i32 to vector<1x128xi32>
    %929 = arith.cmpi eq, %927, %928 : vector<1x128xi32>
    %c48 = arith.constant 48 : index
    %930 = memref.load %arg0[%c48] : memref<60xf32, #tpu.memory_space<smem>>
    %c49 = arith.constant 49 : index
    %931 = memref.load %arg0[%c49] : memref<60xf32, #tpu.memory_space<smem>>
    %cst_302 = arith.constant 1.000000e+00 : f32
    %cst_303 = arith.constant -1.000000e+00 : f32
    %932 = vector.broadcast %cst_302 : f32 to vector<1x128xf32>
    %933 = vector.broadcast %cst_303 : f32 to vector<1x128xf32>
    %934 = arith.select %929, %932, %933 : vector<1x128xi1>, vector<1x128xf32>
    %935 = vector.broadcast %930 : f32 to vector<1x128xf32>
    %936 = arith.mulf %935, %919 : vector<1x128xf32>
    %937 = vector.broadcast %931 : f32 to vector<1x128xf32>
    %938 = arith.mulf %934, %937 : vector<1x128xf32>
    %939 = arith.mulf %938, %925 : vector<1x128xf32>
    %940 = arith.addf %936, %939 : vector<1x128xf32>
    %941 = vector.broadcast %930 : f32 to vector<1x128xf32>
    %942 = arith.mulf %941, %925 : vector<1x128xf32>
    %943 = vector.broadcast %931 : f32 to vector<1x128xf32>
    %944 = arith.mulf %934, %943 : vector<1x128xf32>
    %945 = arith.mulf %944, %919 : vector<1x128xf32>
    %946 = arith.subf %942, %945 : vector<1x128xf32>
    %c16_i32_304 = arith.constant 16 : i32
    %947 = vector.broadcast %c16_i32_304 : i32 to vector<1x128xi32>
    %948 = arith.andi %0, %947 : vector<1x128xi32>
    %c0_i32_305 = arith.constant 0 : i32
    %949 = vector.broadcast %c0_i32_305 : i32 to vector<1x128xi32>
    %950 = arith.cmpi eq, %948, %949 : vector<1x128xi32>
    %c50 = arith.constant 50 : index
    %951 = memref.load %arg0[%c50] : memref<60xf32, #tpu.memory_space<smem>>
    %c51 = arith.constant 51 : index
    %952 = memref.load %arg0[%c51] : memref<60xf32, #tpu.memory_space<smem>>
    %cst_306 = arith.constant 1.000000e+00 : f32
    %cst_307 = arith.constant -1.000000e+00 : f32
    %953 = vector.broadcast %cst_306 : f32 to vector<1x128xf32>
    %954 = vector.broadcast %cst_307 : f32 to vector<1x128xf32>
    %955 = arith.select %950, %953, %954 : vector<1x128xi1>, vector<1x128xf32>
    %956 = vector.broadcast %951 : f32 to vector<1x128xf32>
    %957 = arith.mulf %956, %940 : vector<1x128xf32>
    %958 = vector.broadcast %952 : f32 to vector<1x128xf32>
    %959 = arith.mulf %955, %958 : vector<1x128xf32>
    %960 = arith.mulf %959, %946 : vector<1x128xf32>
    %961 = arith.addf %957, %960 : vector<1x128xf32>
    %962 = vector.broadcast %951 : f32 to vector<1x128xf32>
    %963 = arith.mulf %962, %946 : vector<1x128xf32>
    %964 = vector.broadcast %952 : f32 to vector<1x128xf32>
    %965 = arith.mulf %955, %964 : vector<1x128xf32>
    %966 = arith.mulf %965, %940 : vector<1x128xf32>
    %967 = arith.subf %963, %966 : vector<1x128xf32>
    %c8_i32_308 = arith.constant 8 : i32
    %968 = vector.broadcast %c8_i32_308 : i32 to vector<1x128xi32>
    %969 = arith.andi %0, %968 : vector<1x128xi32>
    %c0_i32_309 = arith.constant 0 : i32
    %970 = vector.broadcast %c0_i32_309 : i32 to vector<1x128xi32>
    %971 = arith.cmpi eq, %969, %970 : vector<1x128xi32>
    %c52 = arith.constant 52 : index
    %972 = memref.load %arg0[%c52] : memref<60xf32, #tpu.memory_space<smem>>
    %c53 = arith.constant 53 : index
    %973 = memref.load %arg0[%c53] : memref<60xf32, #tpu.memory_space<smem>>
    %cst_310 = arith.constant 1.000000e+00 : f32
    %cst_311 = arith.constant -1.000000e+00 : f32
    %974 = vector.broadcast %cst_310 : f32 to vector<1x128xf32>
    %975 = vector.broadcast %cst_311 : f32 to vector<1x128xf32>
    %976 = arith.select %971, %974, %975 : vector<1x128xi1>, vector<1x128xf32>
    %977 = vector.broadcast %972 : f32 to vector<1x128xf32>
    %978 = arith.mulf %977, %961 : vector<1x128xf32>
    %979 = vector.broadcast %973 : f32 to vector<1x128xf32>
    %980 = arith.mulf %976, %979 : vector<1x128xf32>
    %981 = arith.mulf %980, %967 : vector<1x128xf32>
    %982 = arith.addf %978, %981 : vector<1x128xf32>
    %983 = vector.broadcast %972 : f32 to vector<1x128xf32>
    %984 = arith.mulf %983, %967 : vector<1x128xf32>
    %985 = vector.broadcast %973 : f32 to vector<1x128xf32>
    %986 = arith.mulf %976, %985 : vector<1x128xf32>
    %987 = arith.mulf %986, %961 : vector<1x128xf32>
    %988 = arith.subf %984, %987 : vector<1x128xf32>
    %c4_i32_312 = arith.constant 4 : i32
    %989 = vector.broadcast %c4_i32_312 : i32 to vector<1x128xi32>
    %990 = arith.andi %0, %989 : vector<1x128xi32>
    %c0_i32_313 = arith.constant 0 : i32
    %991 = vector.broadcast %c0_i32_313 : i32 to vector<1x128xi32>
    %992 = arith.cmpi eq, %990, %991 : vector<1x128xi32>
    %c54 = arith.constant 54 : index
    %993 = memref.load %arg0[%c54] : memref<60xf32, #tpu.memory_space<smem>>
    %c55 = arith.constant 55 : index
    %994 = memref.load %arg0[%c55] : memref<60xf32, #tpu.memory_space<smem>>
    %cst_314 = arith.constant 1.000000e+00 : f32
    %cst_315 = arith.constant -1.000000e+00 : f32
    %995 = vector.broadcast %cst_314 : f32 to vector<1x128xf32>
    %996 = vector.broadcast %cst_315 : f32 to vector<1x128xf32>
    %997 = arith.select %992, %995, %996 : vector<1x128xi1>, vector<1x128xf32>
    %998 = vector.broadcast %993 : f32 to vector<1x128xf32>
    %999 = arith.mulf %998, %982 : vector<1x128xf32>
    %1000 = vector.broadcast %994 : f32 to vector<1x128xf32>
    %1001 = arith.mulf %997, %1000 : vector<1x128xf32>
    %1002 = arith.mulf %1001, %988 : vector<1x128xf32>
    %1003 = arith.addf %999, %1002 : vector<1x128xf32>
    %1004 = vector.broadcast %993 : f32 to vector<1x128xf32>
    %1005 = arith.mulf %1004, %988 : vector<1x128xf32>
    %1006 = vector.broadcast %994 : f32 to vector<1x128xf32>
    %1007 = arith.mulf %997, %1006 : vector<1x128xf32>
    %1008 = arith.mulf %1007, %982 : vector<1x128xf32>
    %1009 = arith.subf %1005, %1008 : vector<1x128xf32>
    %c2_i32_316 = arith.constant 2 : i32
    %1010 = vector.broadcast %c2_i32_316 : i32 to vector<1x128xi32>
    %1011 = arith.andi %0, %1010 : vector<1x128xi32>
    %c0_i32_317 = arith.constant 0 : i32
    %1012 = vector.broadcast %c0_i32_317 : i32 to vector<1x128xi32>
    %1013 = arith.cmpi eq, %1011, %1012 : vector<1x128xi32>
    %c56 = arith.constant 56 : index
    %1014 = memref.load %arg0[%c56] : memref<60xf32, #tpu.memory_space<smem>>
    %c57 = arith.constant 57 : index
    %1015 = memref.load %arg0[%c57] : memref<60xf32, #tpu.memory_space<smem>>
    %cst_318 = arith.constant 1.000000e+00 : f32
    %cst_319 = arith.constant -1.000000e+00 : f32
    %1016 = vector.broadcast %cst_318 : f32 to vector<1x128xf32>
    %1017 = vector.broadcast %cst_319 : f32 to vector<1x128xf32>
    %1018 = arith.select %1013, %1016, %1017 : vector<1x128xi1>, vector<1x128xf32>
    %1019 = vector.broadcast %1014 : f32 to vector<1x128xf32>
    %1020 = arith.mulf %1019, %1003 : vector<1x128xf32>
    %1021 = vector.broadcast %1015 : f32 to vector<1x128xf32>
    %1022 = arith.mulf %1018, %1021 : vector<1x128xf32>
    %1023 = arith.mulf %1022, %1009 : vector<1x128xf32>
    %1024 = arith.addf %1020, %1023 : vector<1x128xf32>
    %1025 = vector.broadcast %1014 : f32 to vector<1x128xf32>
    %1026 = arith.mulf %1025, %1009 : vector<1x128xf32>
    %1027 = vector.broadcast %1015 : f32 to vector<1x128xf32>
    %1028 = arith.mulf %1018, %1027 : vector<1x128xf32>
    %1029 = arith.mulf %1028, %1003 : vector<1x128xf32>
    %1030 = arith.subf %1026, %1029 : vector<1x128xf32>
    %c1_i32_320 = arith.constant 1 : i32
    %1031 = vector.broadcast %c1_i32_320 : i32 to vector<1x128xi32>
    %1032 = arith.andi %0, %1031 : vector<1x128xi32>
    %c0_i32_321 = arith.constant 0 : i32
    %1033 = vector.broadcast %c0_i32_321 : i32 to vector<1x128xi32>
    %1034 = arith.cmpi eq, %1032, %1033 : vector<1x128xi32>
    %c58 = arith.constant 58 : index
    %1035 = memref.load %arg0[%c58] : memref<60xf32, #tpu.memory_space<smem>>
    %c59 = arith.constant 59 : index
    %1036 = memref.load %arg0[%c59] : memref<60xf32, #tpu.memory_space<smem>>
    %cst_322 = arith.constant 1.000000e+00 : f32
    %cst_323 = arith.constant -1.000000e+00 : f32
    %1037 = vector.broadcast %cst_322 : f32 to vector<1x128xf32>
    %1038 = vector.broadcast %cst_323 : f32 to vector<1x128xf32>
    %1039 = arith.select %1034, %1037, %1038 : vector<1x128xi1>, vector<1x128xf32>
    %1040 = vector.broadcast %1035 : f32 to vector<1x128xf32>
    %1041 = arith.mulf %1040, %1024 : vector<1x128xf32>
    %1042 = vector.broadcast %1036 : f32 to vector<1x128xf32>
    %1043 = arith.mulf %1039, %1042 : vector<1x128xf32>
    %1044 = arith.mulf %1043, %1030 : vector<1x128xf32>
    %1045 = arith.addf %1041, %1044 : vector<1x128xf32>
    %1046 = vector.broadcast %1035 : f32 to vector<1x128xf32>
    %1047 = arith.mulf %1046, %1030 : vector<1x128xf32>
    %1048 = vector.broadcast %1036 : f32 to vector<1x128xf32>
    %1049 = arith.mulf %1039, %1048 : vector<1x128xf32>
    %1050 = arith.mulf %1049, %1024 : vector<1x128xf32>
    %1051 = arith.subf %1047, %1050 : vector<1x128xf32>
    %c32_i32_324 = arith.constant 32 : i32
    %1052 = vector.broadcast %c32_i32_324 : i32 to vector<1x128xi32>
    %1053 = arith.andi %0, %1052 : vector<1x128xi32>
    %c0_i32_325 = arith.constant 0 : i32
    %1054 = vector.broadcast %c0_i32_325 : i32 to vector<1x128xi32>
    %1055 = arith.cmpi eq, %1053, %1054 : vector<1x128xi32>
    %c64_i32_326 = arith.constant 64 : i32
    %1056 = vector.broadcast %c64_i32_326 : i32 to vector<1x128xi32>
    %1057 = arith.andi %0, %1056 : vector<1x128xi32>
    %c0_i32_327 = arith.constant 0 : i32
    %1058 = vector.broadcast %c0_i32_327 : i32 to vector<1x128xi32>
    %1059 = arith.cmpi ne, %1057, %1058 : vector<1x128xi32>
    %c96_i32_328 = arith.constant 96 : i32
    %1060 = tpu.dynamic_rotate %1045 by %c96_i32_328 dim 1 : vector<1x128xf32>, i32 -> vector<1x128xf32>
    %c32_i32_329 = arith.constant 32 : i32
    %1061 = tpu.dynamic_rotate %1045 by %c32_i32_329 dim 1 : vector<1x128xf32>, i32 -> vector<1x128xf32>
    %1062 = arith.select %1055, %1060, %1061 : vector<1x128xi1>, vector<1x128xf32>
    %c96_i32_330 = arith.constant 96 : i32
    %1063 = tpu.dynamic_rotate %1051 by %c96_i32_330 dim 1 : vector<1x128xf32>, i32 -> vector<1x128xf32>
    %c32_i32_331 = arith.constant 32 : i32
    %1064 = tpu.dynamic_rotate %1051 by %c32_i32_331 dim 1 : vector<1x128xf32>, i32 -> vector<1x128xf32>
    %1065 = arith.select %1055, %1063, %1064 : vector<1x128xi1>, vector<1x128xf32>
    %1066 = arith.select %1059, %1062, %1045 : vector<1x128xi1>, vector<1x128xf32>
    %1067 = arith.select %1059, %1065, %1051 : vector<1x128xi1>, vector<1x128xf32>
    %c16_i32_332 = arith.constant 16 : i32
    %1068 = vector.broadcast %c16_i32_332 : i32 to vector<1x128xi32>
    %1069 = arith.andi %0, %1068 : vector<1x128xi32>
    %c0_i32_333 = arith.constant 0 : i32
    %1070 = vector.broadcast %c0_i32_333 : i32 to vector<1x128xi32>
    %1071 = arith.cmpi eq, %1069, %1070 : vector<1x128xi32>
    %c32_i32_334 = arith.constant 32 : i32
    %1072 = vector.broadcast %c32_i32_334 : i32 to vector<1x128xi32>
    %1073 = arith.andi %0, %1072 : vector<1x128xi32>
    %c0_i32_335 = arith.constant 0 : i32
    %1074 = vector.broadcast %c0_i32_335 : i32 to vector<1x128xi32>
    %1075 = arith.cmpi ne, %1073, %1074 : vector<1x128xi32>
    %c112_i32_336 = arith.constant 112 : i32
    %1076 = tpu.dynamic_rotate %1066 by %c112_i32_336 dim 1 : vector<1x128xf32>, i32 -> vector<1x128xf32>
    %c16_i32_337 = arith.constant 16 : i32
    %1077 = tpu.dynamic_rotate %1066 by %c16_i32_337 dim 1 : vector<1x128xf32>, i32 -> vector<1x128xf32>
    %1078 = arith.select %1071, %1076, %1077 : vector<1x128xi1>, vector<1x128xf32>
    %c112_i32_338 = arith.constant 112 : i32
    %1079 = tpu.dynamic_rotate %1067 by %c112_i32_338 dim 1 : vector<1x128xf32>, i32 -> vector<1x128xf32>
    %c16_i32_339 = arith.constant 16 : i32
    %1080 = tpu.dynamic_rotate %1067 by %c16_i32_339 dim 1 : vector<1x128xf32>, i32 -> vector<1x128xf32>
    %1081 = arith.select %1071, %1079, %1080 : vector<1x128xi1>, vector<1x128xf32>
    %1082 = arith.select %1075, %1078, %1066 : vector<1x128xi1>, vector<1x128xf32>
    %1083 = arith.select %1075, %1081, %1067 : vector<1x128xi1>, vector<1x128xf32>
    %c8_i32_340 = arith.constant 8 : i32
    %1084 = vector.broadcast %c8_i32_340 : i32 to vector<1x128xi32>
    %1085 = arith.andi %0, %1084 : vector<1x128xi32>
    %c0_i32_341 = arith.constant 0 : i32
    %1086 = vector.broadcast %c0_i32_341 : i32 to vector<1x128xi32>
    %1087 = arith.cmpi eq, %1085, %1086 : vector<1x128xi32>
    %c16_i32_342 = arith.constant 16 : i32
    %1088 = vector.broadcast %c16_i32_342 : i32 to vector<1x128xi32>
    %1089 = arith.andi %0, %1088 : vector<1x128xi32>
    %c0_i32_343 = arith.constant 0 : i32
    %1090 = vector.broadcast %c0_i32_343 : i32 to vector<1x128xi32>
    %1091 = arith.cmpi ne, %1089, %1090 : vector<1x128xi32>
    %c120_i32_344 = arith.constant 120 : i32
    %1092 = tpu.dynamic_rotate %1082 by %c120_i32_344 dim 1 : vector<1x128xf32>, i32 -> vector<1x128xf32>
    %c8_i32_345 = arith.constant 8 : i32
    %1093 = tpu.dynamic_rotate %1082 by %c8_i32_345 dim 1 : vector<1x128xf32>, i32 -> vector<1x128xf32>
    %1094 = arith.select %1087, %1092, %1093 : vector<1x128xi1>, vector<1x128xf32>
    %c120_i32_346 = arith.constant 120 : i32
    %1095 = tpu.dynamic_rotate %1083 by %c120_i32_346 dim 1 : vector<1x128xf32>, i32 -> vector<1x128xf32>
    %c8_i32_347 = arith.constant 8 : i32
    %1096 = tpu.dynamic_rotate %1083 by %c8_i32_347 dim 1 : vector<1x128xf32>, i32 -> vector<1x128xf32>
    %1097 = arith.select %1087, %1095, %1096 : vector<1x128xi1>, vector<1x128xf32>
    %1098 = arith.select %1091, %1094, %1082 : vector<1x128xi1>, vector<1x128xf32>
    %1099 = arith.select %1091, %1097, %1083 : vector<1x128xi1>, vector<1x128xf32>
    %c4_i32_348 = arith.constant 4 : i32
    %1100 = vector.broadcast %c4_i32_348 : i32 to vector<1x128xi32>
    %1101 = arith.andi %0, %1100 : vector<1x128xi32>
    %c0_i32_349 = arith.constant 0 : i32
    %1102 = vector.broadcast %c0_i32_349 : i32 to vector<1x128xi32>
    %1103 = arith.cmpi eq, %1101, %1102 : vector<1x128xi32>
    %c8_i32_350 = arith.constant 8 : i32
    %1104 = vector.broadcast %c8_i32_350 : i32 to vector<1x128xi32>
    %1105 = arith.andi %0, %1104 : vector<1x128xi32>
    %c0_i32_351 = arith.constant 0 : i32
    %1106 = vector.broadcast %c0_i32_351 : i32 to vector<1x128xi32>
    %1107 = arith.cmpi ne, %1105, %1106 : vector<1x128xi32>
    %c124_i32_352 = arith.constant 124 : i32
    %1108 = tpu.dynamic_rotate %1098 by %c124_i32_352 dim 1 : vector<1x128xf32>, i32 -> vector<1x128xf32>
    %c4_i32_353 = arith.constant 4 : i32
    %1109 = tpu.dynamic_rotate %1098 by %c4_i32_353 dim 1 : vector<1x128xf32>, i32 -> vector<1x128xf32>
    %1110 = arith.select %1103, %1108, %1109 : vector<1x128xi1>, vector<1x128xf32>
    %c124_i32_354 = arith.constant 124 : i32
    %1111 = tpu.dynamic_rotate %1099 by %c124_i32_354 dim 1 : vector<1x128xf32>, i32 -> vector<1x128xf32>
    %c4_i32_355 = arith.constant 4 : i32
    %1112 = tpu.dynamic_rotate %1099 by %c4_i32_355 dim 1 : vector<1x128xf32>, i32 -> vector<1x128xf32>
    %1113 = arith.select %1103, %1111, %1112 : vector<1x128xi1>, vector<1x128xf32>
    %1114 = arith.select %1107, %1110, %1098 : vector<1x128xi1>, vector<1x128xf32>
    %1115 = arith.select %1107, %1113, %1099 : vector<1x128xi1>, vector<1x128xf32>
    %c2_i32_356 = arith.constant 2 : i32
    %1116 = vector.broadcast %c2_i32_356 : i32 to vector<1x128xi32>
    %1117 = arith.andi %0, %1116 : vector<1x128xi32>
    %c0_i32_357 = arith.constant 0 : i32
    %1118 = vector.broadcast %c0_i32_357 : i32 to vector<1x128xi32>
    %1119 = arith.cmpi eq, %1117, %1118 : vector<1x128xi32>
    %c4_i32_358 = arith.constant 4 : i32
    %1120 = vector.broadcast %c4_i32_358 : i32 to vector<1x128xi32>
    %1121 = arith.andi %0, %1120 : vector<1x128xi32>
    %c0_i32_359 = arith.constant 0 : i32
    %1122 = vector.broadcast %c0_i32_359 : i32 to vector<1x128xi32>
    %1123 = arith.cmpi ne, %1121, %1122 : vector<1x128xi32>
    %c126_i32_360 = arith.constant 126 : i32
    %1124 = tpu.dynamic_rotate %1114 by %c126_i32_360 dim 1 : vector<1x128xf32>, i32 -> vector<1x128xf32>
    %c2_i32_361 = arith.constant 2 : i32
    %1125 = tpu.dynamic_rotate %1114 by %c2_i32_361 dim 1 : vector<1x128xf32>, i32 -> vector<1x128xf32>
    %1126 = arith.select %1119, %1124, %1125 : vector<1x128xi1>, vector<1x128xf32>
    %c126_i32_362 = arith.constant 126 : i32
    %1127 = tpu.dynamic_rotate %1115 by %c126_i32_362 dim 1 : vector<1x128xf32>, i32 -> vector<1x128xf32>
    %c2_i32_363 = arith.constant 2 : i32
    %1128 = tpu.dynamic_rotate %1115 by %c2_i32_363 dim 1 : vector<1x128xf32>, i32 -> vector<1x128xf32>
    %1129 = arith.select %1119, %1127, %1128 : vector<1x128xi1>, vector<1x128xf32>
    %1130 = arith.select %1123, %1126, %1114 : vector<1x128xi1>, vector<1x128xf32>
    %1131 = arith.select %1123, %1129, %1115 : vector<1x128xi1>, vector<1x128xf32>
    %c1_i32_364 = arith.constant 1 : i32
    %1132 = vector.broadcast %c1_i32_364 : i32 to vector<1x128xi32>
    %1133 = arith.andi %0, %1132 : vector<1x128xi32>
    %c0_i32_365 = arith.constant 0 : i32
    %1134 = vector.broadcast %c0_i32_365 : i32 to vector<1x128xi32>
    %1135 = arith.cmpi eq, %1133, %1134 : vector<1x128xi32>
    %c2_i32_366 = arith.constant 2 : i32
    %1136 = vector.broadcast %c2_i32_366 : i32 to vector<1x128xi32>
    %1137 = arith.andi %0, %1136 : vector<1x128xi32>
    %c0_i32_367 = arith.constant 0 : i32
    %1138 = vector.broadcast %c0_i32_367 : i32 to vector<1x128xi32>
    %1139 = arith.cmpi ne, %1137, %1138 : vector<1x128xi32>
    %c127_i32_368 = arith.constant 127 : i32
    %1140 = tpu.dynamic_rotate %1130 by %c127_i32_368 dim 1 : vector<1x128xf32>, i32 -> vector<1x128xf32>
    %c1_i32_369 = arith.constant 1 : i32
    %1141 = tpu.dynamic_rotate %1130 by %c1_i32_369 dim 1 : vector<1x128xf32>, i32 -> vector<1x128xf32>
    %1142 = arith.select %1135, %1140, %1141 : vector<1x128xi1>, vector<1x128xf32>
    %c127_i32_370 = arith.constant 127 : i32
    %1143 = tpu.dynamic_rotate %1131 by %c127_i32_370 dim 1 : vector<1x128xf32>, i32 -> vector<1x128xf32>
    %c1_i32_371 = arith.constant 1 : i32
    %1144 = tpu.dynamic_rotate %1131 by %c1_i32_371 dim 1 : vector<1x128xf32>, i32 -> vector<1x128xf32>
    %1145 = arith.select %1135, %1143, %1144 : vector<1x128xi1>, vector<1x128xf32>
    %1146 = arith.select %1139, %1142, %1130 : vector<1x128xi1>, vector<1x128xf32>
    %1147 = arith.select %1139, %1145, %1131 : vector<1x128xi1>, vector<1x128xf32>
    %c64_i32_372 = arith.constant 64 : i32
    %1148 = vector.broadcast %c64_i32_372 : i32 to vector<1x128xi32>
    %1149 = arith.andi %0, %1148 : vector<1x128xi32>
    %c0_i32_373 = arith.constant 0 : i32
    %1150 = vector.broadcast %c0_i32_373 : i32 to vector<1x128xi32>
    %1151 = arith.cmpi eq, %1149, %1150 : vector<1x128xi32>
    %c1_i32_374 = arith.constant 1 : i32
    %1152 = vector.broadcast %c1_i32_374 : i32 to vector<1x128xi32>
    %1153 = arith.andi %0, %1152 : vector<1x128xi32>
    %c0_i32_375 = arith.constant 0 : i32
    %1154 = vector.broadcast %c0_i32_375 : i32 to vector<1x128xi32>
    %1155 = arith.cmpi ne, %1153, %1154 : vector<1x128xi32>
    %c64_i32_376 = arith.constant 64 : i32
    %1156 = tpu.dynamic_rotate %1146 by %c64_i32_376 dim 1 : vector<1x128xf32>, i32 -> vector<1x128xf32>
    %c64_i32_377 = arith.constant 64 : i32
    %1157 = tpu.dynamic_rotate %1146 by %c64_i32_377 dim 1 : vector<1x128xf32>, i32 -> vector<1x128xf32>
    %1158 = arith.select %1151, %1156, %1157 : vector<1x128xi1>, vector<1x128xf32>
    %c64_i32_378 = arith.constant 64 : i32
    %1159 = tpu.dynamic_rotate %1147 by %c64_i32_378 dim 1 : vector<1x128xf32>, i32 -> vector<1x128xf32>
    %c64_i32_379 = arith.constant 64 : i32
    %1160 = tpu.dynamic_rotate %1147 by %c64_i32_379 dim 1 : vector<1x128xf32>, i32 -> vector<1x128xf32>
    %1161 = arith.select %1151, %1159, %1160 : vector<1x128xi1>, vector<1x128xf32>
    %1162 = arith.select %1155, %1158, %1146 : vector<1x128xi1>, vector<1x128xf32>
    %1163 = arith.select %1155, %1161, %1147 : vector<1x128xi1>, vector<1x128xf32>
    %c0_380 = arith.constant 0 : index
    %c0_381 = arith.constant 0 : index
    %1164 = vector.load %arg1[%c0_380, %c0_381] : memref<2x128xf32, #tpu.memory_space<vmem>>, vector<1x128xf32>
    tpu.vector_store %arg1[%c0_380, %c0_381], %1162 {strides = array<i32>} : memref<2x128xf32, #tpu.memory_space<vmem>>, vector<1x128xf32>,
    %c1_382 = arith.constant 1 : index
    %c0_383 = arith.constant 0 : index
    %1165 = vector.load %arg1[%c1_382, %c0_383] : memref<2x128xf32, #tpu.memory_space<vmem>>, vector<1x128xf32>
    tpu.vector_store %arg1[%c1_382, %c0_383], %1163 {strides = array<i32>} : memref<2x128xf32, #tpu.memory_space<vmem>>, vector<1x128xf32>,
    return
  }
}

</mosaic_0001>

<llo_original>
// kernel: tpu_custom_call.1
$region0: #{tpu_custom_call.1}
  #allocation0 [shape = 'u32[]', space=smem, size = 0x4, offset = 0x4, fixed_abs, tag = 'smem constant byte address 0x4 - core index']
  #allocation1 [shape = 'u32[144,128]{1,0:T(1,128)}', space=vmem, size = 0x12000, scoped, tag = 'internal scratch']
  %s0 = inlined_call_operand.hbm [shape: f32[60], index: 0, kind: input, shape index: {}]
  %s1 = inlined_call_operand.hbm [shape: f32[2,128], index: 1, kind: output, shape index: {}]
  %s2 = sld [smem:[#allocation0]]
  $region18: #{tpu_custom_call.1} parent=0
    _
  %s4 = ssub.s32 1, %s2
  %s5 = scalar_select 0, %s4, %s2
  $region1: #{tpu_custom_call.1} parent=0
    #allocation2 [shape = 'u8[512]{0}', space=smem, size = 0x200, scoped, tag = 'input window, operand 0, single buffered']
    #allocation3 [shape = 's32[1]{0}', space=sflag, size = 0x4, scoped, tag = 'scoped memory for tpu_custom_call.1']
    #allocation4 [shape = 's32[1]{0}', space=sflag, size = 0x4, scoped, tag = 'scoped memory for tpu_custom_call.1']
    #allocation5 [shape = 'u8[1024]{0}', space=vmem, size = 0x400, scoped, tag = 'output window, operand 0, single buffered']
    %6 = vsyncpa [#allocation4], 0
    %7 = vsyncpa [#allocation3], 0
    // Predicated region
    $region2: #{tpu_custom_call.1} parent=1 // pred_check
      _
    $region3: #{tpu_custom_call.1} parent=1 // pred_check_branch
      %9 = sbr.rel (0) target = $region5
    $region4: #{tpu_custom_call.1} parent=1 // pred_region
      %s11 = ssub.s32 16, 16
      %12 = vsyncadd [#allocation4], %s11
      %15 = dma.hbm_to_smem %s0, 16, [#allocation2], [#allocation4]
    $region5: #{tpu_custom_call.1} parent=1 // pred_fallthru
      _
    // Predicated region
    $region6: #{tpu_custom_call.1} parent=1 // pred_check
      _
    $region7: #{tpu_custom_call.1} parent=1 // pred_check_branch
      %17 = sbr.rel (0) target = $region9
    $region8: #{tpu_custom_call.1} parent=1 // pred_region
      %18 = dma.done [#allocation4], 16
    $region9: #{tpu_custom_call.1} parent=1 // pred_fallthru
      _
    %19 = sfence
    %v20 = vlaneseq
    %v21 = vand.u32 %v20, 127
    %vm22 = vcmp.eq.s32.totalorder %v21, 0
    %v23 = vsel %vm22, 1.0, 0.0
    %v24 = vand.u32 %v21, 64
    %vm25 = vcmp.eq.s32.totalorder %v24, 0
    %26 = vrot.lane.b32.xlu0 %v23, 64
    %v27 = vpop.permute.xlu0 %26
    %28 = vrot.lane.b32.xlu0 0.0, 64
    %v29 = vpop.permute.xlu0 %28
    %v30 = vadd.f32 %v23, %v27
    %v31 = vsub.f32 %v27, %v23
    %v32 = vsel %vm25, %v30, %v31
    %v33 = vmul.f32 %v32, 0.70710677
    %v34 = vadd.f32 %v29, 0.0
    %v35 = vsel %vm25, %v34, %v29
    %v36 = vmul.f32 %v35, 0.70710677
    %v37 = vand.u32 %v21, 32
    %vm38 = vcmp.eq.s32.totalorder %v37, 0
    %39 = vrot.lane.b32.xlu0 %v33, 96
    %v40 = vpop.permute.xlu0 %39
    %41 = vrot.lane.b32.xlu0 %v33, 32
    %v42 = vpop.permute.xlu0 %41
    %v43 = vsel %vm38, %v40, %v42
    %44 = vrot.lane.b32.xlu0 %v36, 96
    %v45 = vpop.permute.xlu0 %44
    %46 = vrot.lane.b32.xlu0 %v36, 32
    %v47 = vpop.permute.xlu0 %46
    %v48 = vsel %vm38, %v45, %v47
    %v49 = vadd.f32 %v33, %v43
    %v50 = vsub.f32 %v43, %v33
    %v51 = vsel %vm38, %v49, %v50
    %v52 = vmul.f32 %v51, 0.70710677
    %v53 = vadd.f32 %v36, %v48
    %v54 = vsub.f32 %v48, %v36
    %v55 = vsel %vm38, %v53, %v54
    %v56 = vmul.f32 %v55, 0.70710677
    %v57 = vand.u32 %v21, 16
    %vm58 = vcmp.eq.s32.totalorder %v57, 0
    %59 = vrot.lane.b32.xlu0 %v52, 112
    %v60 = vpop.permute.xlu0 %59
    %61 = vrot.lane.b32.xlu0 %v52, 16
    %v62 = vpop.permute.xlu0 %61
    %v63 = vsel %vm58, %v60, %v62
    %64 = vrot.lane.b32.xlu0 %v56, 112
    %v65 = vpop.permute.xlu0 %64
    %66 = vrot.lane.b32.xlu0 %v56, 16
    %v67 = vpop.permute.xlu0 %66
    %v68 = vsel %vm58, %v65, %v67
    %v69 = vadd.f32 %v52, %v63
    %v70 = vsub.f32 %v63, %v52
    %v71 = vsel %vm58, %v69, %v70
    %v72 = vmul.f32 %v71, 0.70710677
    %v73 = vadd.f32 %v56, %v68
    %v74 = vsub.f32 %v68, %v56
    %v75 = vsel %vm58, %v73, %v74
    %v76 = vmul.f32 %v75, 0.70710677
    %v77 = vand.u32 %v21, 8
    %vm78 = vcmp.eq.s32.totalorder %v77, 0
    %79 = vrot.lane.b32.xlu0 %v72, 120
    %v80 = vpop.permute.xlu0 %79
    %81 = vrot.lane.b32.xlu0 %v72, 8
    %v82 = vpop.permute.xlu0 %81
    %v83 = vsel %vm78, %v80, %v82
    %84 = vrot.lane.b32.xlu0 %v76, 120
    %v85 = vpop.permute.xlu0 %84
    %86 = vrot.lane.b32.xlu0 %v76, 8
    %v87 = vpop.permute.xlu0 %86
    %v88 = vsel %vm78, %v85, %v87
    %v89 = vadd.f32 %v72, %v83
    %v90 = vsub.f32 %v83, %v72
    %v91 = vsel %vm78, %v89, %v90
    %v92 = vmul.f32 %v91, 0.70710677
    %v93 = vadd.f32 %v76, %v88
    %v94 = vsub.f32 %v88, %v76
    %v95 = vsel %vm78, %v93, %v94
    %v96 = vmul.f32 %v95, 0.70710677
    %v97 = vand.u32 %v21, 4
    %vm98 = vcmp.eq.s32.totalorder %v97, 0
    %99 = vrot.lane.b32.xlu0 %v92, 124
    %v100 = vpop.permute.xlu0 %99
    %101 = vrot.lane.b32.xlu0 %v92, 4
    %v102 = vpop.permute.xlu0 %101
    %v103 = vsel %vm98, %v100, %v102
    %104 = vrot.lane.b32.xlu0 %v96, 124
    %v105 = vpop.permute.xlu0 %104
    %106 = vrot.lane.b32.xlu0 %v96, 4
    %v107 = vpop.permute.xlu0 %106
    %v108 = vsel %vm98, %v105, %v107
    %v109 = vadd.f32 %v92, %v103
    %v110 = vsub.f32 %v103, %v92
    %v111 = vsel %vm98, %v109, %v110
    %v112 = vmul.f32 %v111, 0.70710677
    %v113 = vadd.f32 %v96, %v108
    %v114 = vsub.f32 %v108, %v96
    %v115 = vsel %vm98, %v113, %v114
    %v116 = vmul.f32 %v115, 0.70710677
    %v117 = vand.u32 %v21, 2
    %vm118 = vcmp.eq.s32.totalorder %v117, 0
    %119 = vrot.lane.b32.xlu0 %v112, 126
    %v120 = vpop.permute.xlu0 %119
    %121 = vrot.lane.b32.xlu0 %v112, 2
    %v122 = vpop.permute.xlu0 %121
    %v123 = vsel %vm118, %v120, %v122
    %124 = vrot.lane.b32.xlu0 %v116, 126
    %v125 = vpop.permute.xlu0 %124
    %126 = vrot.lane.b32.xlu0 %v116, 2
    %v127 = vpop.permute.xlu0 %126
    %v128 = vsel %vm118, %v125, %v127
    %v129 = vadd.f32 %v112, %v123
    %v130 = vsub.f32 %v123, %v112
    %v131 = vsel %vm118, %v129, %v130
    %v132 = vmul.f32 %v131, 0.70710677
    %v133 = vadd.f32 %v116, %v128
    %v134 = vsub.f32 %v128, %v116
    %v135 = vsel %vm118, %v133, %v134
    %v136 = vmul.f32 %v135, 0.70710677
    %v137 = vand.u32 %v21, 1
    %vm138 = vcmp.eq.s32.totalorder %v137, 0
    %139 = vrot.lane.b32.xlu0 %v132, 127
    %v140 = vpop.permute.xlu0 %139
    %141 = vrot.lane.b32.xlu0 %v132, 1
    %v142 = vpop.permute.xlu0 %141
    %v143 = vsel %vm138, %v140, %v142
    %144 = vrot.lane.b32.xlu0 %v136, 127
    %v145 = vpop.permute.xlu0 %144
    %146 = vrot.lane.b32.xlu0 %v136, 1
    %v147 = vpop.permute.xlu0 %146
    %v148 = vsel %vm138, %v145, %v147
    %v149 = vadd.f32 %v132, %v143
    %v150 = vsub.f32 %v143, %v132
    %v151 = vsel %vm138, %v149, %v150
    %v152 = vmul.f32 %v151, 0.70710677
    %v153 = vadd.f32 %v136, %v148
    %v154 = vsub.f32 %v148, %v136
    %v155 = vsel %vm138, %v153, %v154
    %v156 = vmul.f32 %v155, 0.70710677
    %vm157 = vcmp.ne.s32.totalorder %v24, 0
    %158 = vrot.lane.b32.xlu0 %v152, 96
    %v159 = vpop.permute.xlu0 %158
    %160 = vrot.lane.b32.xlu0 %v152, 32
    %v161 = vpop.permute.xlu0 %160
    %v162 = vsel %vm38, %v159, %v161
    %163 = vrot.lane.b32.xlu0 %v156, 96
    %v164 = vpop.permute.xlu0 %163
    %165 = vrot.lane.b32.xlu0 %v156, 32
    %v166 = vpop.permute.xlu0 %165
    %v167 = vsel %vm38, %v164, %v166
    %v168 = vsel %vm157, %v162, %v152
    %v169 = vsel %vm157, %v167, %v156
    %vm170 = vcmp.ne.s32.totalorder %v37, 0
    %171 = vrot.lane.b32.xlu0 %v168, 112
    %v172 = vpop.permute.xlu0 %171
    %173 = vrot.lane.b32.xlu0 %v168, 16
    %v174 = vpop.permute.xlu0 %173
    %v175 = vsel %vm58, %v172, %v174
    %176 = vrot.lane.b32.xlu0 %v169, 112
    %v177 = vpop.permute.xlu0 %176
    %178 = vrot.lane.b32.xlu0 %v169, 16
    %v179 = vpop.permute.xlu0 %178
    %v180 = vsel %vm58, %v177, %v179
    %v181 = vsel %vm170, %v175, %v168
    %v182 = vsel %vm170, %v180, %v169
    %vm183 = vcmp.ne.s32.totalorder %v57, 0
    %184 = vrot.lane.b32.xlu0 %v181, 120
    %v185 = vpop.permute.xlu0 %184
    %186 = vrot.lane.b32.xlu0 %v181, 8
    %v187 = vpop.permute.xlu0 %186
    %v188 = vsel %vm78, %v185, %v187
    %189 = vrot.lane.b32.xlu0 %v182, 120
    %v190 = vpop.permute.xlu0 %189
    %191 = vrot.lane.b32.xlu0 %v182, 8
    %v192 = vpop.permute.xlu0 %191
    %v193 = vsel %vm78, %v190, %v192
    %v194 = vsel %vm183, %v188, %v181
    %v195 = vsel %vm183, %v193, %v182
    %vm196 = vcmp.ne.s32.totalorder %v77, 0
    %197 = vrot.lane.b32.xlu0 %v194, 124
    %v198 = vpop.permute.xlu0 %197
    %199 = vrot.lane.b32.xlu0 %v194, 4
    %v200 = vpop.permute.xlu0 %199
    %v201 = vsel %vm98, %v198, %v200
    %202 = vrot.lane.b32.xlu0 %v195, 124
    %v203 = vpop.permute.xlu0 %202
    %204 = vrot.lane.b32.xlu0 %v195, 4
    %v205 = vpop.permute.xlu0 %204
    %v206 = vsel %vm98, %v203, %v205
    %v207 = vsel %vm196, %v201, %v194
    %v208 = vsel %vm196, %v206, %v195
    %vm209 = vcmp.ne.s32.totalorder %v97, 0
    %210 = vrot.lane.b32.xlu0 %v207, 126
    %v211 = vpop.permute.xlu0 %210
    %212 = vrot.lane.b32.xlu0 %v207, 2
    %v213 = vpop.permute.xlu0 %212
    %v214 = vsel %vm118, %v211, %v213
    %215 = vrot.lane.b32.xlu0 %v208, 126
    %v216 = vpop.permute.xlu0 %215
    %217 = vrot.lane.b32.xlu0 %v208, 2
    %v218 = vpop.permute.xlu0 %217
    %v219 = vsel %vm118, %v216, %v218
    %v220 = vsel %vm209, %v214, %v207
    %v221 = vsel %vm209, %v219, %v208
    %vm222 = vcmp.ne.s32.totalorder %v117, 0
    %223 = vrot.lane.b32.xlu0 %v220, 127
    %v224 = vpop.permute.xlu0 %223
    %225 = vrot.lane.b32.xlu0 %v220, 1
    %v226 = vpop.permute.xlu0 %225
    %v227 = vsel %vm138, %v224, %v226
    %228 = vrot.lane.b32.xlu0 %v221, 127
    %v229 = vpop.permute.xlu0 %228
    %230 = vrot.lane.b32.xlu0 %v221, 1
    %v231 = vpop.permute.xlu0 %230
    %v232 = vsel %vm138, %v229, %v231
    %v233 = vsel %vm222, %v227, %v220
    %v234 = vsel %vm222, %v232, %v221
    %235 = vrot.lane.b32.xlu0 %v233, 112
    %v236 = vpop.permute.xlu0 %235
    %237 = vrot.lane.b32.xlu0 %v233, 16
    %v238 = vpop.permute.xlu0 %237
    %v239 = vsel %vm58, %v236, %v238
    %240 = vrot.lane.b32.xlu0 %v234, 112
    %v241 = vpop.permute.xlu0 %240
    %242 = vrot.lane.b32.xlu0 %v234, 16
    %v243 = vpop.permute.xlu0 %242
    %v244 = vsel %vm58, %v241, %v243
    %245 = vrot.lane.b32.xlu0 %v239, 124
    %v246 = vpop.permute.xlu0 %245
    %247 = vrot.lane.b32.xlu0 %v239, 4
    %v248 = vpop.permute.xlu0 %247
    %v249 = vsel %vm98, %v246, %v248
    %250 = vrot.lane.b32.xlu0 %v244, 124
    %v251 = vpop.permute.xlu0 %250
    %252 = vrot.lane.b32.xlu0 %v244, 4
    %v253 = vpop.permute.xlu0 %252
    %v254 = vsel %vm98, %v251, %v253
    %v255 = vsel %vm98, 1.0, -1.0
    %v256 = vmul.f32 %v255, %v254
    %v257 = vsub.f32 0.0, %v255
    %v258 = vmul.f32 %v257, %v249
    %v259 = vsub.f32 0.0, %v256
    %v260 = vsel %vm222, %v259, %v256
    %v261 = vsub.f32 0.0, %v258
    %v262 = vsel %vm222, %v261, %v258
    %vm263 = vmand %vm170, %vm196
    %v264 = vsub.f32 0.0, %v260
    %v265 = vsel %vm263, %v264, %v260
    %v266 = vsub.f32 0.0, %v262
    %v267 = vsel %vm263, %v266, %v262
    %s268 = sld [smem:[#allocation2]]
    %s269 = sld [smem:[#allocation2 + $0x1]]
    %270 = vrot.lane.b32.xlu0 %v265, 64
    %v271 = vpop.permute.xlu0 %270
    %272 = vrot.lane.b32.xlu0 %v267, 64
    %v273 = vpop.permute.xlu0 %272
    %v274 = vstv %s268
    %v275 = vmul.f32 %v274, %v265
    %v276 = vstv %s269
    %v277 = vmul.f32 %v276, %v273
    %v278 = vadd.f32 %v275, %v277
    %v279 = vmul.f32 %v274, %v267
    %v280 = vmul.f32 %v276, %v271
    %v281 = vsub.f32 %v279, %v280
    %s282 = sld [smem:[#allocation2 + $0x2]]
    %s283 = sld [smem:[#allocation2 + $0x3]]
    %v284 = vsel %vm138, 1.0, -1.0
    %v285 = vstv %s282
    %v286 = vmul.f32 %v285, %v278
    %v287 = vstv %s283
    %v288 = vmul.f32 %v284, %v287
    %v289 = vmul.f32 %v288, %v281
    %v290 = vadd.f32 %v286, %v289
    %v291 = vmul.f32 %v285, %v281
    %v292 = vmul.f32 %v288, %v278
    %v293 = vsub.f32 %v291, %v292
    %s294 = sld [smem:[#allocation2 + $0x4]]
    %s295 = sld [smem:[#allocation2 + $0x5]]
    %296 = vrot.lane.b32.xlu0 %v290, 64
    %v297 = vpop.permute.xlu0 %296
    %298 = vrot.lane.b32.xlu0 %v293, 64
    %v299 = vpop.permute.xlu0 %298
    %v300 = vstv %s294
    %v301 = vmul.f32 %v300, %v290
    %v302 = vstv %s295
    %v303 = vmul.f32 %v302, %v299
    %v304 = vadd.f32 %v301, %v303
    %v305 = vmul.f32 %v300, %v293
    %v306 = vmul.f32 %v302, %v297
    %v307 = vsub.f32 %v305, %v306
    %s308 = sld [smem:[#allocation2 + $0x6]]
    %s309 = sld [smem:[#allocation2 + $0x7]]
    %310 = vrot.lane.b32.xlu0 %v304, 96
    %v311 = vpop.permute.xlu0 %310
    %312 = vrot.lane.b32.xlu0 %v304, 32
    %v313 = vpop.permute.xlu0 %312
    %v314 = vsel %vm38, %v311, %v313
    %315 = vrot.lane.b32.xlu0 %v307, 96
    %v316 = vpop.permute.xlu0 %315
    %317 = vrot.lane.b32.xlu0 %v307, 32
    %v318 = vpop.permute.xlu0 %317
    %v319 = vsel %vm38, %v316, %v318
    %v320 = vstv %s308
    %v321 = vmul.f32 %v320, %v304
    %v322 = vstv %s309
    %v323 = vmul.f32 %v322, %v319
    %v324 = vadd.f32 %v321, %v323
    %v325 = vmul.f32 %v320, %v307
    %v326 = vmul.f32 %v322, %v314
    %v327 = vsub.f32 %v325, %v326
    %s328 = sld [smem:[#allocation2 + $0x8]]
    %s329 = sld [smem:[#allocation2 + $0x9]]
    %330 = vrot.lane.b32.xlu0 %v324, 112
    %v331 = vpop.permute.xlu0 %330
    %332 = vrot.lane.b32.xlu0 %v324, 16
    %v333 = vpop.permute.xlu0 %332
    %v334 = vsel %vm58, %v331, %v333
    %335 = vrot.lane.b32.xlu0 %v327, 112
    %v336 = vpop.permute.xlu0 %335
    %337 = vrot.lane.b32.xlu0 %v327, 16
    %v338 = vpop.permute.xlu0 %337
    %v339 = vsel %vm58, %v336, %v338
    %v340 = vstv %s328
    %v341 = vmul.f32 %v340, %v324
    %v342 = vstv %s329
    %v343 = vmul.f32 %v342, %v339
    %v344 = vadd.f32 %v341, %v343
    %v345 = vmul.f32 %v340, %v327
    %v346 = vmul.f32 %v342, %v334
    %v347 = vsub.f32 %v345, %v346
    %s348 = sld [smem:[#allocation2 + $0xa]]
    %s349 = sld [smem:[#allocation2 + $0xb]]
    %350 = vrot.lane.b32.xlu0 %v344, 120
    %v351 = vpop.permute.xlu0 %350
    %352 = vrot.lane.b32.xlu0 %v344, 8
    %v353 = vpop.permute.xlu0 %352
    %v354 = vsel %vm78, %v351, %v353
    %355 = vrot.lane.b32.xlu0 %v347, 120
    %v356 = vpop.permute.xlu0 %355
    %357 = vrot.lane.b32.xlu0 %v347, 8
    %v358 = vpop.permute.xlu0 %357
    %v359 = vsel %vm78, %v356, %v358
    %v360 = vstv %s348
    %v361 = vmul.f32 %v360, %v344
    %v362 = vstv %s349
    %v363 = vmul.f32 %v362, %v359
    %v364 = vadd.f32 %v361, %v363
    %v365 = vmul.f32 %v360, %v347
    %v366 = vmul.f32 %v362, %v354
    %v367 = vsub.f32 %v365, %v366
    %s368 = sld [smem:[#allocation2 + $0xc]]
    %s369 = sld [smem:[#allocation2 + $0xd]]
    %370 = vrot.lane.b32.xlu0 %v364, 124
    %v371 = vpop.permute.xlu0 %370
    %372 = vrot.lane.b32.xlu0 %v364, 4
    %v373 = vpop.permute.xlu0 %372
    %v374 = vsel %vm98, %v371, %v373
    %375 = vrot.lane.b32.xlu0 %v367, 124
    %v376 = vpop.permute.xlu0 %375
    %377 = vrot.lane.b32.xlu0 %v367, 4
    %v378 = vpop.permute.xlu0 %377
    %v379 = vsel %vm98, %v376, %v378
    %v380 = vstv %s368
    %v381 = vmul.f32 %v380, %v364
    %v382 = vstv %s369
    %v383 = vmul.f32 %v382, %v379
    %v384 = vadd.f32 %v381, %v383
    %v385 = vmul.f32 %v380, %v367
    %v386 = vmul.f32 %v382, %v374
    %v387 = vsub.f32 %v385, %v386
    %s388 = sld [smem:[#allocation2 + $0xe]]
    %s389 = sld [smem:[#allocation2 + $0xf]]
    %390 = vrot.lane.b32.xlu0 %v384, 126
    %v391 = vpop.permute.xlu0 %390
    %392 = vrot.lane.b32.xlu0 %v384, 2
    %v393 = vpop.permute.xlu0 %392
    %v394 = vsel %vm118, %v391, %v393
    %395 = vrot.lane.b32.xlu0 %v387, 126
    %v396 = vpop.permute.xlu0 %395
    %397 = vrot.lane.b32.xlu0 %v387, 2
    %v398 = vpop.permute.xlu0 %397
    %v399 = vsel %vm118, %v396, %v398
    %v400 = vstv %s388
    %v401 = vmul.f32 %v400, %v384
    %v402 = vstv %s389
    %v403 = vmul.f32 %v402, %v399
    %v404 = vadd.f32 %v401, %v403
    %v405 = vmul.f32 %v400, %v387
    %v406 = vmul.f32 %v402, %v394
    %v407 = vsub.f32 %v405, %v406
    %s408 = sld [smem:[#allocation2 + $0x10]]
    %s409 = sld [smem:[#allocation2 + $0x11]]
    %410 = vrot.lane.b32.xlu0 %v404, 127
    %v411 = vpop.permute.xlu0 %410
    %412 = vrot.lane.b32.xlu0 %v404, 1
    %v413 = vpop.permute.xlu0 %412
    %v414 = vsel %vm138, %v411, %v413
    %415 = vrot.lane.b32.xlu0 %v407, 127
    %v416 = vpop.permute.xlu0 %415
    %417 = vrot.lane.b32.xlu0 %v407, 1
    %v418 = vpop.permute.xlu0 %417
    %v419 = vsel %vm138, %v416, %v418
    %v420 = vstv %s408
    %v421 = vmul.f32 %v420, %v404
    %v422 = vstv %s409
    %v423 = vmul.f32 %v422, %v419
    %v424 = vadd.f32 %v421, %v423
    %v425 = vmul.f32 %v420, %v407
    %v426 = vmul.f32 %v422, %v414
    %v427 = vsub.f32 %v425, %v426
    %s428 = sld [smem:[#allocation2 + $0x12]]
    %s429 = sld [smem:[#allocation2 + $0x13]]
    %v430 = vsel %vm25, 1.0, -1.0
    %v431 = vstv %s428
    %v432 = vmul.f32 %v431, %v424
    %v433 = vstv %s429
    %v434 = vmul.f32 %v430, %v433
    %v435 = vmul.f32 %v434, %v427
    %v436 = vadd.f32 %v432, %v435
    %v437 = vmul.f32 %v431, %v427
    %v438 = vmul.f32 %v434, %v424
    %v439 = vsub.f32 %v437, %v438
    %s440 = sld [smem:[#allocation2 + $0x14]]
    %s441 = sld [smem:[#allocation2 + $0x15]]
    %v442 = vsel %vm38, 1.0, -1.0
    %v443 = vstv %s440
    %v444 = vmul.f32 %v443, %v436
    %v445 = vstv %s441
    %v446 = vmul.f32 %v442, %v445
    %v447 = vmul.f32 %v446, %v439
    %v448 = vadd.f32 %v444, %v447
    %v449 = vmul.f32 %v443, %v439
    %v450 = vmul.f32 %v446, %v436
    %v451 = vsub.f32 %v449, %v450
    %s452 = sld [smem:[#allocation2 + $0x16]]
    %s453 = sld [smem:[#allocation2 + $0x17]]
    %v454 = vsel %vm58, 1.0, -1.0
    %v455 = vstv %s452
    %v456 = vmul.f32 %v455, %v448
    %v457 = vstv %s453
    %v458 = vmul.f32 %v454, %v457
    %v459 = vmul.f32 %v458, %v451
    %v460 = vadd.f32 %v456, %v459
    %v461 = vmul.f32 %v455, %v451
    %v462 = vmul.f32 %v458, %v448
    %v463 = vsub.f32 %v461, %v462
    %s464 = sld [smem:[#allocation2 + $0x18]]
    %s465 = sld [smem:[#allocation2 + $0x19]]
    %v466 = vsel %vm78, 1.0, -1.0
    %v467 = vstv %s464
    %v468 = vmul.f32 %v467, %v460
    %v469 = vstv %s465
    %v470 = vmul.f32 %v466, %v469
    %v471 = vmul.f32 %v470, %v463
    %v472 = vadd.f32 %v468, %v471
    %v473 = vmul.f32 %v467, %v463
    %v474 = vmul.f32 %v470, %v460
    %v475 = vsub.f32 %v473, %v474
    %s476 = sld [smem:[#allocation2 + $0x1a]]
    %s477 = sld [smem:[#allocation2 + $0x1b]]
    %v478 = vstv %s476
    %v479 = vmul.f32 %v478, %v472
    %v480 = vstv %s477
    %v481 = vmul.f32 %v255, %v480
    %v482 = vmul.f32 %v481, %v475
    %v483 = vadd.f32 %v479, %v482
    %v484 = vmul.f32 %v478, %v475
    %v485 = vmul.f32 %v481, %v472
    %v486 = vsub.f32 %v484, %v485
    %s487 = sld [smem:[#allocation2 + $0x1c]]
    %s488 = sld [smem:[#allocation2 + $0x1d]]
    %v489 = vsel %vm118, 1.0, -1.0
    %v490 = vstv %s487
    %v491 = vmul.f32 %v490, %v483
    %v492 = vstv %s488
    %v493 = vmul.f32 %v489, %v492
    %v494 = vmul.f32 %v493, %v486
    %v495 = vadd.f32 %v491, %v494
    %v496 = vmul.f32 %v490, %v486
    %v497 = vmul.f32 %v493, %v483
    %v498 = vsub.f32 %v496, %v497
    %s499 = sld [smem:[#allocation2 + $0x1e]]
    %s500 = sld [smem:[#allocation2 + $0x1f]]
    %v501 = vstv %s499
    %v502 = vmul.f32 %v501, %v495
    %v503 = vstv %s500
    %v504 = vmul.f32 %v284, %v503
    %v505 = vmul.f32 %v504, %v498
    %v506 = vadd.f32 %v502, %v505
    %v507 = vmul.f32 %v501, %v498
    %v508 = vmul.f32 %v504, %v495
    %v509 = vsub.f32 %v507, %v508
    %510 = vrot.lane.b32.xlu0 %v506, 96
    %v511 = vpop.permute.xlu0 %510
    %512 = vrot.lane.b32.xlu0 %v506, 32
    %v513 = vpop.permute.xlu0 %512
    %v514 = vsel %vm38, %v511, %v513
    %515 = vrot.lane.b32.xlu0 %v509, 96
    %v516 = vpop.permute.xlu0 %515
    %517 = vrot.lane.b32.xlu0 %v509, 32
    %v518 = vpop.permute.xlu0 %517
    %v519 = vsel %vm38, %v516, %v518
    %v520 = vsel %vm157, %v514, %v506
    %v521 = vsel %vm157, %v519, %v509
    %522 = vrot.lane.b32.xlu0 %v520, 112
    %v523 = vpop.permute.xlu0 %522
    %524 = vrot.lane.b32.xlu0 %v520, 16
    %v525 = vpop.permute.xlu0 %524
    %v526 = vsel %vm58, %v523, %v525
    %527 = vrot.lane.b32.xlu0 %v521, 112
    %v528 = vpop.permute.xlu0 %527
    %529 = vrot.lane.b32.xlu0 %v521, 16
    %v530 = vpop.permute.xlu0 %529
    %v531 = vsel %vm58, %v528, %v530
    %v532 = vsel %vm170, %v526, %v520
    %v533 = vsel %vm170, %v531, %v521
    %534 = vrot.lane.b32.xlu0 %v532, 120
    %v535 = vpop.permute.xlu0 %534
    %536 = vrot.lane.b32.xlu0 %v532, 8
    %v537 = vpop.permute.xlu0 %536
    %v538 = vsel %vm78, %v535, %v537
    %539 = vrot.lane.b32.xlu0 %v533, 120
    %v540 = vpop.permute.xlu0 %539
    %541 = vrot.lane.b32.xlu0 %v533, 8
    %v542 = vpop.permute.xlu0 %541
    %v543 = vsel %vm78, %v540, %v542
    %v544 = vsel %vm183, %v538, %v532
    %v545 = vsel %vm183, %v543, %v533
    %546 = vrot.lane.b32.xlu0 %v544, 124
    %v547 = vpop.permute.xlu0 %546
    %548 = vrot.lane.b32.xlu0 %v544, 4
    %v549 = vpop.permute.xlu0 %548
    %v550 = vsel %vm98, %v547, %v549
    %551 = vrot.lane.b32.xlu0 %v545, 124
    %v552 = vpop.permute.xlu0 %551
    %553 = vrot.lane.b32.xlu0 %v545, 4
    %v554 = vpop.permute.xlu0 %553
    %v555 = vsel %vm98, %v552, %v554
    %v556 = vsel %vm196, %v550, %v544
    %v557 = vsel %vm196, %v555, %v545
    %558 = vrot.lane.b32.xlu0 %v556, 126
    %v559 = vpop.permute.xlu0 %558
    %560 = vrot.lane.b32.xlu0 %v556, 2
    %v561 = vpop.permute.xlu0 %560
    %v562 = vsel %vm118, %v559, %v561
    %563 = vrot.lane.b32.xlu0 %v557, 126
    %v564 = vpop.permute.xlu0 %563
    %565 = vrot.lane.b32.xlu0 %v557, 2
    %v566 = vpop.permute.xlu0 %565
    %v567 = vsel %vm118, %v564, %v566
    %v568 = vsel %vm209, %v562, %v556
    %v569 = vsel %vm209, %v567, %v557
    %570 = vrot.lane.b32.xlu0 %v568, 127
    %v571 = vpop.permute.xlu0 %570
    %572 = vrot.lane.b32.xlu0 %v568, 1
    %v573 = vpop.permute.xlu0 %572
    %v574 = vsel %vm138, %v571, %v573
    %575 = vrot.lane.b32.xlu0 %v569, 127
    %v576 = vpop.permute.xlu0 %575
    %577 = vrot.lane.b32.xlu0 %v569, 1
    %v578 = vpop.permute.xlu0 %577
    %v579 = vsel %vm138, %v576, %v578
    %v580 = vsel %vm222, %v574, %v568
    %v581 = vsel %vm222, %v579, %v569
    %vm582 = vcmp.ne.s32.totalorder %v137, 0
    %583 = vrot.lane.b32.xlu0 %v580, 64
    %v584 = vpop.permute.xlu0 %583
    %585 = vrot.lane.b32.xlu0 %v581, 64
    %v586 = vpop.permute.xlu0 %585
    %v587 = vsel %vm582, %v584, %v580
    %v588 = vsel %vm582, %v586, %v581
    %s589 = sld [smem:[#allocation2 + $0x20]]
    %s590 = sld [smem:[#allocation2 + $0x21]]
    %591 = vrot.lane.b32.xlu0 %v587, 64
    %v592 = vpop.permute.xlu0 %591
    %593 = vrot.lane.b32.xlu0 %v588, 64
    %v594 = vpop.permute.xlu0 %593
    %v595 = vstv %s589
    %v596 = vmul.f32 %v595, %v587
    %v597 = vstv %s590
    %v598 = vmul.f32 %v597, %v594
    %v599 = vadd.f32 %v596, %v598
    %v600 = vmul.f32 %v595, %v588
    %v601 = vmul.f32 %v597, %v592
    %v602 = vsub.f32 %v600, %v601
    %s603 = sld [smem:[#allocation2 + $0x22]]
    %s604 = sld [smem:[#allocation2 + $0x23]]
    %605 = vrot.lane.b32.xlu0 %v599, 96
    %v606 = vpop.permute.xlu0 %605
    %607 = vrot.lane.b32.xlu0 %v599, 32
    %v608 = vpop.permute.xlu0 %607
    %v609 = vsel %vm38, %v606, %v608
    %610 = vrot.lane.b32.xlu0 %v602, 96
    %v611 = vpop.permute.xlu0 %610
    %612 = vrot.lane.b32.xlu0 %v602, 32
    %v613 = vpop.permute.xlu0 %612
    %v614 = vsel %vm38, %v611, %v613
    %v615 = vstv %s603
    %v616 = vmul.f32 %v615, %v599
    %v617 = vstv %s604
    %v618 = vmul.f32 %v617, %v614
    %v619 = vadd.f32 %v616, %v618
    %v620 = vmul.f32 %v615, %v602
    %v621 = vmul.f32 %v617, %v609
    %v622 = vsub.f32 %v620, %v621
    %s623 = sld [smem:[#allocation2 + $0x24]]
    %s624 = sld [smem:[#allocation2 + $0x25]]
    %625 = vrot.lane.b32.xlu0 %v619, 112
    %v626 = vpop.permute.xlu0 %625
    %627 = vrot.lane.b32.xlu0 %v619, 16
    %v628 = vpop.permute.xlu0 %627
    %v629 = vsel %vm58, %v626, %v628
    %630 = vrot.lane.b32.xlu0 %v622, 112
    %v631 = vpop.permute.xlu0 %630
    %632 = vrot.lane.b32.xlu0 %v622, 16
    %v633 = vpop.permute.xlu0 %632
    %v634 = vsel %vm58, %v631, %v633
    %v635 = vstv %s623
    %v636 = vmul.f32 %v635, %v619
    %v637 = vstv %s624
    %v638 = vmul.f32 %v637, %v634
    %v639 = vadd.f32 %v636, %v638
    %v640 = vmul.f32 %v635, %v622
    %v641 = vmul.f32 %v637, %v629
    %v642 = vsub.f32 %v640, %v641
    %s643 = sld [smem:[#allocation2 + $0x26]]
    %s644 = sld [smem:[#allocation2 + $0x27]]
    %645 = vrot.lane.b32.xlu0 %v639, 120
    %v646 = vpop.permute.xlu0 %645
    %647 = vrot.lane.b32.xlu0 %v639, 8
    %v648 = vpop.permute.xlu0 %647
    %v649 = vsel %vm78, %v646, %v648
    %650 = vrot.lane.b32.xlu0 %v642, 120
    %v651 = vpop.permute.xlu0 %650
    %652 = vrot.lane.b32.xlu0 %v642, 8
    %v653 = vpop.permute.xlu0 %652
    %v654 = vsel %vm78, %v651, %v653
    %v655 = vstv %s643
    %v656 = vmul.f32 %v655, %v639
    %v657 = vstv %s644
    %v658 = vmul.f32 %v657, %v654
    %v659 = vadd.f32 %v656, %v658
    %v660 = vmul.f32 %v655, %v642
    %v661 = vmul.f32 %v657, %v649
    %v662 = vsub.f32 %v660, %v661
    %s663 = sld [smem:[#allocation2 + $0x28]]
    %s664 = sld [smem:[#allocation2 + $0x29]]
    %665 = vrot.lane.b32.xlu0 %v659, 124
    %v666 = vpop.permute.xlu0 %665
    %667 = vrot.lane.b32.xlu0 %v659, 4
    %v668 = vpop.permute.xlu0 %667
    %v669 = vsel %vm98, %v666, %v668
    %670 = vrot.lane.b32.xlu0 %v662, 124
    %v671 = vpop.permute.xlu0 %670
    %672 = vrot.lane.b32.xlu0 %v662, 4
    %v673 = vpop.permute.xlu0 %672
    %v674 = vsel %vm98, %v671, %v673
    %v675 = vstv %s663
    %v676 = vmul.f32 %v675, %v659
    %v677 = vstv %s664
    %v678 = vmul.f32 %v677, %v674
    %v679 = vadd.f32 %v676, %v678
    %v680 = vmul.f32 %v675, %v662
    %v681 = vmul.f32 %v677, %v669
    %v682 = vsub.f32 %v680, %v681
    %s683 = sld [smem:[#allocation2 + $0x2a]]
    %s684 = sld [smem:[#allocation2 + $0x2b]]
    %685 = vrot.lane.b32.xlu0 %v679, 126
    %v686 = vpop.permute.xlu0 %685
    %687 = vrot.lane.b32.xlu0 %v679, 2
    %v688 = vpop.permute.xlu0 %687
    %v689 = vsel %vm118, %v686, %v688
    %690 = vrot.lane.b32.xlu0 %v682, 126
    %v691 = vpop.permute.xlu0 %690
    %692 = vrot.lane.b32.xlu0 %v682, 2
    %v693 = vpop.permute.xlu0 %692
    %v694 = vsel %vm118, %v691, %v693
    %v695 = vstv %s683
    %v696 = vmul.f32 %v695, %v679
    %v697 = vstv %s684
    %v698 = vmul.f32 %v697, %v694
    %v699 = vadd.f32 %v696, %v698
    %v700 = vmul.f32 %v695, %v682
    %v701 = vmul.f32 %v697, %v689
    %v702 = vsub.f32 %v700, %v701
    %s703 = sld [smem:[#allocation2 + $0x2c]]
    %s704 = sld [smem:[#allocation2 + $0x2d]]
    %705 = vrot.lane.b32.xlu0 %v699, 127
    %v706 = vpop.permute.xlu0 %705
    %707 = vrot.lane.b32.xlu0 %v699, 1
    %v708 = vpop.permute.xlu0 %707
    %v709 = vsel %vm138, %v706, %v708
    %710 = vrot.lane.b32.xlu0 %v702, 127
    %v711 = vpop.permute.xlu0 %710
    %712 = vrot.lane.b32.xlu0 %v702, 1
    %v713 = vpop.permute.xlu0 %712
    %v714 = vsel %vm138, %v711, %v713
    %v715 = vstv %s703
    %v716 = vmul.f32 %v715, %v699
    %v717 = vstv %s704
    %v718 = vmul.f32 %v717, %v714
    %v719 = vadd.f32 %v716, %v718
    %v720 = vmul.f32 %v715, %v702
    %v721 = vmul.f32 %v717, %v709
    %v722 = vsub.f32 %v720, %v721
    %s723 = sld [smem:[#allocation2 + $0x2e]]
    %s724 = sld [smem:[#allocation2 + $0x2f]]
    %v725 = vstv %s723
    %v726 = vmul.f32 %v725, %v719
    %v727 = vstv %s724
    %v728 = vmul.f32 %v430, %v727
    %v729 = vmul.f32 %v728, %v722
    %v730 = vadd.f32 %v726, %v729
    %v731 = vmul.f32 %v725, %v722
    %v732 = vmul.f32 %v728, %v719
    %v733 = vsub.f32 %v731, %v732
    %s734 = sld [smem:[#allocation2 + $0x30]]
    %s735 = sld [smem:[#allocation2 + $0x31]]
    %v736 = vstv %s734
    %v737 = vmul.f32 %v736, %v730
    %v738 = vstv %s735
    %v739 = vmul.f32 %v442, %v738
    %v740 = vmul.f32 %v739, %v733
    %v741 = vadd.f32 %v737, %v740
    %v742 = vmul.f32 %v736, %v733
    %v743 = vmul.f32 %v739, %v730
    %v744 = vsub.f32 %v742, %v743
    %s745 = sld [smem:[#allocation2 + $0x32]]
    %s746 = sld [smem:[#allocation2 + $0x33]]
    %v747 = vstv %s745
    %v748 = vmul.f32 %v747, %v741
    %v749 = vstv %s746
    %v750 = vmul.f32 %v454, %v749
    %v751 = vmul.f32 %v750, %v744
    %v752 = vadd.f32 %v748, %v751
    %v753 = vmul.f32 %v747, %v744
    %v754 = vmul.f32 %v750, %v741
    %v755 = vsub.f32 %v753, %v754
    %s756 = sld [smem:[#allocation2 + $0x34]]
    %s757 = sld [smem:[#allocation2 + $0x35]]
    %v758 = vstv %s756
    %v759 = vmul.f32 %v758, %v752
    %v760 = vstv %s757
    %v761 = vmul.f32 %v466, %v760
    %v762 = vmul.f32 %v761, %v755
    %v763 = vadd.f32 %v759, %v762
    %v764 = vmul.f32 %v758, %v755
    %v765 = vmul.f32 %v761, %v752
    %v766 = vsub.f32 %v764, %v765
    %s767 = sld [smem:[#allocation2 + $0x36]]
    %s768 = sld [smem:[#allocation2 + $0x37]]
    %v769 = vstv %s767
    %v770 = vmul.f32 %v769, %v763
    %v771 = vstv %s768
    %v772 = vmul.f32 %v255, %v771
    %v773 = vmul.f32 %v772, %v766
    %v774 = vadd.f32 %v770, %v773
    %v775 = vmul.f32 %v769, %v766
    %v776 = vmul.f32 %v772, %v763
    %v777 = vsub.f32 %v775, %v776
    %s778 = sld [smem:[#allocation2 + $0x38]]
    %s779 = sld [smem:[#allocation2 + $0x39]]
    %v780 = vstv %s778
    %v781 = vmul.f32 %v780, %v774
    %v782 = vstv %s779
    %v783 = vmul.f32 %v489, %v782
    %v784 = vmul.f32 %v783, %v777
    %v785 = vadd.f32 %v781, %v784
    %v786 = vmul.f32 %v780, %v777
    %v787 = vmul.f32 %v783, %v774
    %v788 = vsub.f32 %v786, %v787
    %s789 = sld [smem:[#allocation2 + $0x3a]]
    %s790 = sld [smem:[#allocation2 + $0x3b]]
    %v791 = vstv %s789
    %v792 = vmul.f32 %v791, %v785
    %v793 = vstv %s790
    %v794 = vmul.f32 %v284, %v793
    %v795 = vmul.f32 %v794, %v788
    %v796 = vadd.f32 %v792, %v795
    %v797 = vmul.f32 %v791, %v788
    %v798 = vmul.f32 %v794, %v785
    %v799 = vsub.f32 %v797, %v798
    %800 = vrot.lane.b32.xlu0 %v796, 96
    %v801 = vpop.permute.xlu0 %800
    %802 = vrot.lane.b32.xlu0 %v796, 32
    %v803 = vpop.permute.xlu0 %802
    %v804 = vsel %vm38, %v801, %v803
    %805 = vrot.lane.b32.xlu0 %v799, 96
    %v806 = vpop.permute.xlu0 %805
    %807 = vrot.lane.b32.xlu0 %v799, 32
    %v808 = vpop.permute.xlu0 %807
    %v809 = vsel %vm38, %v806, %v808
    %v810 = vsel %vm157, %v804, %v796
    %v811 = vsel %vm157, %v809, %v799
    %812 = vrot.lane.b32.xlu0 %v810, 112
    %v813 = vpop.permute.xlu0 %812
    %814 = vrot.lane.b32.xlu0 %v810, 16
    %v815 = vpop.permute.xlu0 %814
    %v816 = vsel %vm58, %v813, %v815
    %817 = vrot.lane.b32.xlu0 %v811, 112
    %v818 = vpop.permute.xlu0 %817
    %819 = vrot.lane.b32.xlu0 %v811, 16
    %v820 = vpop.permute.xlu0 %819
    %v821 = vsel %vm58, %v818, %v820
    %v822 = vsel %vm170, %v816, %v810
    %v823 = vsel %vm170, %v821, %v811
    %824 = vrot.lane.b32.xlu0 %v822, 120
    %v825 = vpop.permute.xlu0 %824
    %826 = vrot.lane.b32.xlu0 %v822, 8
    %v827 = vpop.permute.xlu0 %826
    %v828 = vsel %vm78, %v825, %v827
    %829 = vrot.lane.b32.xlu0 %v823, 120
    %v830 = vpop.permute.xlu0 %829
    %831 = vrot.lane.b32.xlu0 %v823, 8
    %v832 = vpop.permute.xlu0 %831
    %v833 = vsel %vm78, %v830, %v832
    %v834 = vsel %vm183, %v828, %v822
    %v835 = vsel %vm183, %v833, %v823
    %836 = vrot.lane.b32.xlu0 %v834, 124
    %v837 = vpop.permute.xlu0 %836
    %838 = vrot.lane.b32.xlu0 %v834, 4
    %v839 = vpop.permute.xlu0 %838
    %v840 = vsel %vm98, %v837, %v839
    %841 = vrot.lane.b32.xlu0 %v835, 124
    %v842 = vpop.permute.xlu0 %841
    %843 = vrot.lane.b32.xlu0 %v835, 4
    %v844 = vpop.permute.xlu0 %843
    %v845 = vsel %vm98, %v842, %v844
    %v846 = vsel %vm196, %v840, %v834
    %v847 = vsel %vm196, %v845, %v835
    %848 = vrot.lane.b32.xlu0 %v846, 126
    %v849 = vpop.permute.xlu0 %848
    %850 = vrot.lane.b32.xlu0 %v846, 2
    %v851 = vpop.permute.xlu0 %850
    %v852 = vsel %vm118, %v849, %v851
    %853 = vrot.lane.b32.xlu0 %v847, 126
    %v854 = vpop.permute.xlu0 %853
    %855 = vrot.lane.b32.xlu0 %v847, 2
    %v856 = vpop.permute.xlu0 %855
    %v857 = vsel %vm118, %v854, %v856
    %v858 = vsel %vm209, %v852, %v846
    %v859 = vsel %vm209, %v857, %v847
    %860 = vrot.lane.b32.xlu0 %v858, 127
    %v861 = vpop.permute.xlu0 %860
    %862 = vrot.lane.b32.xlu0 %v858, 1
    %v863 = vpop.permute.xlu0 %862
    %v864 = vsel %vm138, %v861, %v863
    %865 = vrot.lane.b32.xlu0 %v859, 127
    %v866 = vpop.permute.xlu0 %865
    %867 = vrot.lane.b32.xlu0 %v859, 1
    %v868 = vpop.permute.xlu0 %867
    %v869 = vsel %vm138, %v866, %v868
    %v870 = vsel %vm222, %v864, %v858
    %v871 = vsel %vm222, %v869, %v859
    %872 = vrot.lane.b32.xlu0 %v870, 64
    %v873 = vpop.permute.xlu0 %872
    %874 = vrot.lane.b32.xlu0 %v871, 64
    %v875 = vpop.permute.xlu0 %874
    %v876 = vsel %vm582, %v873, %v870
    %v877 = vsel %vm582, %v875, %v871
    %878 = vst [vmem:[#allocation5] sm:$0x1] %v876
    %879 = vst [vmem:[#allocation5 + $0x1] sm:$0x1] %v877
    // Predicated region
    $region10: #{tpu_custom_call.1} parent=1 // pred_check
      _
    $region11: #{tpu_custom_call.1} parent=1 // pred_check_branch
      %881 = sbr.rel (0) target = $region13
    $region12: #{tpu_custom_call.1} parent=1 // pred_region
      %s883 = ssub.s32 32, 32
      %884 = vsyncadd [#allocation3], %s883
      %s886 = sshll.u32 [#allocation5], 4
      %s887 = int_to_ptr.vmem [resolvable:$true] %s886
      %889 = dma.vmem_to_hbm [thread:$0]  %s887, 32, %s1, [#allocation3]
    $region13: #{tpu_custom_call.1} parent=1 // pred_fallthru
      _
    // Predicated region
    $region14: #{tpu_custom_call.1} parent=1 // pred_check
      _
    $region15: #{tpu_custom_call.1} parent=1 // pred_check_branch
      %891 = sbr.rel (0) target = $region17
    $region16: #{tpu_custom_call.1} parent=1 // pred_region
      %892 = dma.done [#allocation3], 32
    $region17: #{tpu_custom_call.1} parent=1 // pred_fallthru
      _
    %893 = vsyncpa [#allocation3], 1
    %894 = vsyncpa [#allocation4], 1

</llo_original>
